<compile_context>
chip_gen: v7x
topology: tpu7x:2x2x1
jax: 0.10.0
libtpu: 0.0.40
codegen_flags: <defaults>
</compile_context>

<pallas_src>
from functools import partial

import jax
import jax.numpy as jnp
import numpy as np
from jax.experimental import pallas as pl
from jax.experimental.pallas import tpu as pltpu


def make_rnn_kernel(layer_dim, seq_len, batch):
    def kernel(*refs):
        # refs: x, [w_ih_T, w_hh_T, b] * layer_dim, fc_w_pad, fc_b_pad, out, seq_scratch
        x_ref = refs[0]                     # (S*B, input_dim), time-major flattened
        idx = 1
        w_ih, w_hh, bias = [], [], []
        for _ in range(layer_dim):
            w_ih.append(refs[idx])          # (in_l, H)  pre-transposed
            w_hh.append(refs[idx + 1])      # (H, H)     pre-transposed
            bias.append(refs[idx + 2])      # (1, H)     = b_ih + b_hh
            idx += 3
        fcw_ref = refs[idx]                 # (H, out_pad) pre-transposed + lane-padded
        fcb_ref = refs[idx + 1]             # (1, out_pad)
        out_ref = refs[idx + 2]             # (B, out_pad)
        seq_ref = refs[idx + 3]             # VMEM scratch (S*B, H): prev layer outputs

        B, S = batch, seq_len
        H = w_hh[0].shape[0]

        h = jnp.zeros((B, H), jnp.float32)
        for l in range(layer_dim):
            last = (l == layer_dim - 1)
            layer_in = x_ref[...] if l == 0 else seq_ref[...]      # (S*B, in_l)

            # Hoisted input projection: one batched matmul for all S timesteps,
            # bias folded in here (one broadcast per layer, not per step).
            proj = jnp.dot(layer_in, w_ih[l][...],
                           preferred_element_type=jnp.float32) + bias[l][...]  # (S*B, H)
            whh = w_hh[l][...]                                      # (H, H)

            h = jnp.zeros((B, H), jnp.float32)                      # h0 = zeros per layer
            for t in range(S):
                pre = proj[t * B:(t + 1) * B, :] + jnp.dot(
                    h, whh, preferred_element_type=jnp.float32)
                h = jnp.maximum(pre, 0.0)                           # relu nonlinearity
                if not last:
                    # feed next layer; top layer's sequence is never read -> skip stores
                    seq_ref[t * B:(t + 1) * B, :] = h

        # fc(out[:, -1, :]) == fc applied to the top layer's last carry.
        out_ref[...] = (jnp.dot(h, fcw_ref[...], preferred_element_type=jnp.float32)
                        + fcb_ref[...])
    return kernel


@partial(jax.jit, static_argnames=("layer_dim", "hidden_dim", "output_dim"))
def rnn_model_forward(x, params, *, layer_dim, hidden_dim, output_dim):
    """params: dict with w_ih_{l} (H,in), w_hh_{l} (H,H), b_{l} (1,H) = b_ih+b_hh,
    fc_w (out,H), fc_b (1,out).  x: (B, S, input_dim).  Returns (B, output_dim)."""
    B, S, in_dim = x.shape
    out_pad = ((output_dim + 127) // 128) * 128          # lane-dense output store

    # Time-major + flattened so the kernel only does contiguous, aligned row-block reads.
    x_tm = jnp.transpose(x, (1, 0, 2)).reshape(S * B, in_dim)

    inputs = [x_tm]
    for l in range(layer_dim):
        inputs += [params[f"w_ih_{l}"].T,                 # (in_l, H)
                   params[f"w_hh_{l}"].T,                 # (H, H)
                   params[f"b_{l}"]]                      # (1, H)
    fcw_pad = jnp.zeros((hidden_dim, out_pad), jnp.float32).at[:, :output_dim].set(
        params["fc_w"].T)
    fcb_pad = jnp.zeros((1, out_pad), jnp.float32).at[:, :output_dim].set(
        params["fc_b"])
    inputs += [fcw_pad, fcb_pad]

    kernel = make_rnn_kernel(layer_dim, S, B)
    out_padded = pl.pallas_call(
        kernel,
        out_shape=jax.ShapeDtypeStruct((B, out_pad), jnp.float32),
        in_specs=[pl.BlockSpec(memory_space=pltpu.MemorySpace.VMEM)] * len(inputs),
        out_specs=pl.BlockSpec(memory_space=pltpu.MemorySpace.VMEM),
        scratch_shapes=[pltpu.VMEM((S * B, hidden_dim), jnp.float32)],
    )(*inputs)
    return out_padded[:, :output_dim]


def reference_forward(x, params, *, layer_dim):
    """Pure-JAX reference matching nn.RNN(relu, batch_first) + Linear on last step."""
    B, S, _ = x.shape
    layer_in = x
    for l in range(layer_dim):
        w_ih = params[f"w_ih_{l}"]
        w_hh = params[f"w_hh_{l}"]
        b = params[f"b_{l}"]
        H = w_hh.shape[0]
        h = jnp.zeros((B, H), jnp.float32)
        outs = []
        for t in range(S):
            h = jax.nn.relu(layer_in[:, t, :] @ w_ih.T + h @ w_hh.T + b)
            outs.append(h)
        layer_in = jnp.stack(outs, axis=1)
    last = layer_in[:, -1, :]
    return last @ params["fc_w"].T + params["fc_b"]


if __name__ == "__main__":
    # Small shapes consistent with the module.
    batch, seq_len = 8, 8
    input_dim, hidden_dim, layer_dim, output_dim = 16, 32, 2, 8

    key = jax.random.PRNGKey(0)
    keys = jax.random.split(key, 4 * layer_dim + 3)
    k = 1.0 / np.sqrt(hidden_dim)

    params = {}
    ki = 0
    for l in range(layer_dim):
        in_sz = input_dim if l == 0 else hidden_dim
        params[f"w_ih_{l}"] = jax.random.uniform(keys[ki], (hidden_dim, in_sz),
                                                 jnp.float32, -k, k); ki += 1
        params[f"w_hh_{l}"] = jax.random.uniform(keys[ki], (hidden_dim, hidden_dim),
                                                 jnp.float32, -k, k); ki += 1
        b_ih = jax.random.uniform(keys[ki], (hidden_dim,), jnp.float32, -k, k); ki += 1
        b_hh = jax.random.uniform(keys[ki], (hidden_dim,), jnp.float32, -k, k); ki += 1
        params[f"b_{l}"] = (b_ih + b_hh).reshape(1, hidden_dim)
    params["fc_w"] = jax.random.uniform(keys[ki], (output_dim, hidden_dim),
                                        jnp.float32, -k, k); ki += 1
    params["fc_b"] = jax.random.uniform(keys[ki], (output_dim,),
                                        jnp.float32, -k, k).reshape(1, output_dim); ki += 1

    x = jax.random.normal(keys[ki], (batch, seq_len, input_dim), jnp.float32)

    out = rnn_model_forward(x, params, layer_dim=layer_dim,
                            hidden_dim=hidden_dim, output_dim=output_dim)
    out = jax.block_until_ready(out)

    ref = reference_forward(x, params, layer_dim=layer_dim)
    np.testing.assert_allclose(np.asarray(out), np.asarray(ref), rtol=1e-5, atol=1e-5)

    print("KERNEL_OK")
</pallas_src>

<mosaic_0001>
module attributes {stable_mosaic.version = 11 : i64} {
  func.func @kernel(%arg0: memref<64x16xf32, #tpu.memory_space<vmem>>, %arg1: memref<16x32xf32, #tpu.memory_space<vmem>>, %arg2: memref<32x32xf32, #tpu.memory_space<vmem>>, %arg3: memref<1x32xf32, #tpu.memory_space<vmem>>, %arg4: memref<32x32xf32, #tpu.memory_space<vmem>>, %arg5: memref<32x32xf32, #tpu.memory_space<vmem>>, %arg6: memref<1x32xf32, #tpu.memory_space<vmem>>, %arg7: memref<32x128xf32, #tpu.memory_space<vmem>>, %arg8: memref<1x128xf32, #tpu.memory_space<vmem>>, %arg9: memref<8x128xf32, #tpu.memory_space<vmem>>, %arg10: memref<64x32xf32, #tpu.memory_space<vmem>>) attributes {dimension_semantics = [], scalar_prefetch = 0 : i64, scratch_operands = 1 : i64, tpu.core_type = #tpu.core_type<tc>} {
    %c0 = arith.constant 0 : index
    %c0_0 = arith.constant 0 : index
    %0 = vector.load %arg0[%c0, %c0_0] : memref<64x16xf32, #tpu.memory_space<vmem>>, vector<64x16xf32>
    %c0_1 = arith.constant 0 : index
    %c0_2 = arith.constant 0 : index
    %1 = vector.load %arg1[%c0_1, %c0_2] : memref<16x32xf32, #tpu.memory_space<vmem>>, vector<16x32xf32>
    %cst = arith.constant dense<0.000000e+00> : vector<64x32xf32>
    %2 = tpu.matmul %0, %1, %cst {dimension_numbers = #tpu.dot_dimension_numbers<[1], [0], [0], [1], [0, 0, 1, 1], [], []>} : vector<64x16xf32>, vector<16x32xf32>, vector<64x32xf32> -> vector<64x32xf32>
    %c0_3 = arith.constant 0 : index
    %c0_4 = arith.constant 0 : index
    %3 = vector.load %arg3[%c0_3, %c0_4] : memref<1x32xf32, #tpu.memory_space<vmem>>, vector<1x32xf32>
    %4 = vector.broadcast %3 : vector<1x32xf32> to vector<64x32xf32>
    %5 = arith.addf %2, %4 : vector<64x32xf32>
    %c0_5 = arith.constant 0 : index
    %c0_6 = arith.constant 0 : index
    %6 = vector.load %arg2[%c0_5, %c0_6] : memref<32x32xf32, #tpu.memory_space<vmem>>, vector<32x32xf32>
    %cst_7 = arith.constant 0.000000e+00 : f32
    %7 = vector.broadcast %cst_7 : f32 to vector<8x32xf32>
    %8 = vector.extract_strided_slice %5 {offsets = [0, 0], sizes = [8, 32], strides = [1, 1]} : vector<64x32xf32> to vector<8x32xf32>
    %cst_8 = arith.constant dense<0.000000e+00> : vector<8x32xf32>
    %9 = tpu.matmul %7, %6, %cst_8 {dimension_numbers = #tpu.dot_dimension_numbers<[1], [0], [0], [1], [0, 0, 1, 1], [], []>} : vector<8x32xf32>, vector<32x32xf32>, vector<8x32xf32> -> vector<8x32xf32>
    %10 = arith.addf %8, %9 : vector<8x32xf32>
    %cst_9 = arith.constant 0.000000e+00 : f32
    %11 = vector.broadcast %cst_9 : f32 to vector<8x32xf32>
    %12 = arith.maximumf %10, %11 : vector<8x32xf32>
    %c0_10 = arith.constant 0 : index
    %c0_11 = arith.constant 0 : index
    %13 = vector.load %arg10[%c0_10, %c0_11] : memref<64x32xf32, #tpu.memory_space<vmem>>, vector<8x32xf32>
    tpu.vector_store %arg10[%c0_10, %c0_11], %12 {strides = array<i32>} : memref<64x32xf32, #tpu.memory_space<vmem>>, vector<8x32xf32>,
    %14 = vector.extract_strided_slice %5 {offsets = [8, 0], sizes = [8, 32], strides = [1, 1]} : vector<64x32xf32> to vector<8x32xf32>
    %cst_12 = arith.constant dense<0.000000e+00> : vector<8x32xf32>
    %15 = tpu.matmul %12, %6, %cst_12 {dimension_numbers = #tpu.dot_dimension_numbers<[1], [0], [0], [1], [0, 0, 1, 1], [], []>} : vector<8x32xf32>, vector<32x32xf32>, vector<8x32xf32> -> vector<8x32xf32>
    %16 = arith.addf %14, %15 : vector<8x32xf32>
    %cst_13 = arith.constant 0.000000e+00 : f32
    %17 = vector.broadcast %cst_13 : f32 to vector<8x32xf32>
    %18 = arith.maximumf %16, %17 : vector<8x32xf32>
    %c8 = arith.constant 8 : index
    %c0_14 = arith.constant 0 : index
    %19 = vector.load %arg10[%c8, %c0_14] : memref<64x32xf32, #tpu.memory_space<vmem>>, vector<8x32xf32>
    tpu.vector_store %arg10[%c8, %c0_14], %18 {strides = array<i32>} : memref<64x32xf32, #tpu.memory_space<vmem>>, vector<8x32xf32>,
    %20 = vector.extract_strided_slice %5 {offsets = [16, 0], sizes = [8, 32], strides = [1, 1]} : vector<64x32xf32> to vector<8x32xf32>
    %cst_15 = arith.constant dense<0.000000e+00> : vector<8x32xf32>
    %21 = tpu.matmul %18, %6, %cst_15 {dimension_numbers = #tpu.dot_dimension_numbers<[1], [0], [0], [1], [0, 0, 1, 1], [], []>} : vector<8x32xf32>, vector<32x32xf32>, vector<8x32xf32> -> vector<8x32xf32>
    %22 = arith.addf %20, %21 : vector<8x32xf32>
    %cst_16 = arith.constant 0.000000e+00 : f32
    %23 = vector.broadcast %cst_16 : f32 to vector<8x32xf32>
    %24 = arith.maximumf %22, %23 : vector<8x32xf32>
    %c16 = arith.constant 16 : index
    %c0_17 = arith.constant 0 : index
    %25 = vector.load %arg10[%c16, %c0_17] : memref<64x32xf32, #tpu.memory_space<vmem>>, vector<8x32xf32>
    tpu.vector_store %arg10[%c16, %c0_17], %24 {strides = array<i32>} : memref<64x32xf32, #tpu.memory_space<vmem>>, vector<8x32xf32>,
    %26 = vector.extract_strided_slice %5 {offsets = [24, 0], sizes = [8, 32], strides = [1, 1]} : vector<64x32xf32> to vector<8x32xf32>
    %cst_18 = arith.constant dense<0.000000e+00> : vector<8x32xf32>
    %27 = tpu.matmul %24, %6, %cst_18 {dimension_numbers = #tpu.dot_dimension_numbers<[1], [0], [0], [1], [0, 0, 1, 1], [], []>} : vector<8x32xf32>, vector<32x32xf32>, vector<8x32xf32> -> vector<8x32xf32>
    %28 = arith.addf %26, %27 : vector<8x32xf32>
    %cst_19 = arith.constant 0.000000e+00 : f32
    %29 = vector.broadcast %cst_19 : f32 to vector<8x32xf32>
    %30 = arith.maximumf %28, %29 : vector<8x32xf32>
    %c24 = arith.constant 24 : index
    %c0_20 = arith.constant 0 : index
    %31 = vector.load %arg10[%c24, %c0_20] : memref<64x32xf32, #tpu.memory_space<vmem>>, vector<8x32xf32>
    tpu.vector_store %arg10[%c24, %c0_20], %30 {strides = array<i32>} : memref<64x32xf32, #tpu.memory_space<vmem>>, vector<8x32xf32>,
    %32 = vector.extract_strided_slice %5 {offsets = [32, 0], sizes = [8, 32], strides = [1, 1]} : vector<64x32xf32> to vector<8x32xf32>
    %cst_21 = arith.constant dense<0.000000e+00> : vector<8x32xf32>
    %33 = tpu.matmul %30, %6, %cst_21 {dimension_numbers = #tpu.dot_dimension_numbers<[1], [0], [0], [1], [0, 0, 1, 1], [], []>} : vector<8x32xf32>, vector<32x32xf32>, vector<8x32xf32> -> vector<8x32xf32>
    %34 = arith.addf %32, %33 : vector<8x32xf32>
    %cst_22 = arith.constant 0.000000e+00 : f32
    %35 = vector.broadcast %cst_22 : f32 to vector<8x32xf32>
    %36 = arith.maximumf %34, %35 : vector<8x32xf32>
    %c32 = arith.constant 32 : index
    %c0_23 = arith.constant 0 : index
    %37 = vector.load %arg10[%c32, %c0_23] : memref<64x32xf32, #tpu.memory_space<vmem>>, vector<8x32xf32>
    tpu.vector_store %arg10[%c32, %c0_23], %36 {strides = array<i32>} : memref<64x32xf32, #tpu.memory_space<vmem>>, vector<8x32xf32>,
    %38 = vector.extract_strided_slice %5 {offsets = [40, 0], sizes = [8, 32], strides = [1, 1]} : vector<64x32xf32> to vector<8x32xf32>
    %cst_24 = arith.constant dense<0.000000e+00> : vector<8x32xf32>
    %39 = tpu.matmul %36, %6, %cst_24 {dimension_numbers = #tpu.dot_dimension_numbers<[1], [0], [0], [1], [0, 0, 1, 1], [], []>} : vector<8x32xf32>, vector<32x32xf32>, vector<8x32xf32> -> vector<8x32xf32>
    %40 = arith.addf %38, %39 : vector<8x32xf32>
    %cst_25 = arith.constant 0.000000e+00 : f32
    %41 = vector.broadcast %cst_25 : f32 to vector<8x32xf32>
    %42 = arith.maximumf %40, %41 : vector<8x32xf32>
    %c40 = arith.constant 40 : index
    %c0_26 = arith.constant 0 : index
    %43 = vector.load %arg10[%c40, %c0_26] : memref<64x32xf32, #tpu.memory_space<vmem>>, vector<8x32xf32>
    tpu.vector_store %arg10[%c40, %c0_26], %42 {strides = array<i32>} : memref<64x32xf32, #tpu.memory_space<vmem>>, vector<8x32xf32>,
    %44 = vector.extract_strided_slice %5 {offsets = [48, 0], sizes = [8, 32], strides = [1, 1]} : vector<64x32xf32> to vector<8x32xf32>
    %cst_27 = arith.constant dense<0.000000e+00> : vector<8x32xf32>
    %45 = tpu.matmul %42, %6, %cst_27 {dimension_numbers = #tpu.dot_dimension_numbers<[1], [0], [0], [1], [0, 0, 1, 1], [], []>} : vector<8x32xf32>, vector<32x32xf32>, vector<8x32xf32> -> vector<8x32xf32>
    %46 = arith.addf %44, %45 : vector<8x32xf32>
    %cst_28 = arith.constant 0.000000e+00 : f32
    %47 = vector.broadcast %cst_28 : f32 to vector<8x32xf32>
    %48 = arith.maximumf %46, %47 : vector<8x32xf32>
    %c48 = arith.constant 48 : index
    %c0_29 = arith.constant 0 : index
    %49 = vector.load %arg10[%c48, %c0_29] : memref<64x32xf32, #tpu.memory_space<vmem>>, vector<8x32xf32>
    tpu.vector_store %arg10[%c48, %c0_29], %48 {strides = array<i32>} : memref<64x32xf32, #tpu.memory_space<vmem>>, vector<8x32xf32>,
    %50 = vector.extract_strided_slice %5 {offsets = [56, 0], sizes = [8, 32], strides = [1, 1]} : vector<64x32xf32> to vector<8x32xf32>
    %cst_30 = arith.constant dense<0.000000e+00> : vector<8x32xf32>
    %51 = tpu.matmul %48, %6, %cst_30 {dimension_numbers = #tpu.dot_dimension_numbers<[1], [0], [0], [1], [0, 0, 1, 1], [], []>} : vector<8x32xf32>, vector<32x32xf32>, vector<8x32xf32> -> vector<8x32xf32>
    %52 = arith.addf %50, %51 : vector<8x32xf32>
    %cst_31 = arith.constant 0.000000e+00 : f32
    %53 = vector.broadcast %cst_31 : f32 to vector<8x32xf32>
    %54 = arith.maximumf %52, %53 : vector<8x32xf32>
    %c56 = arith.constant 56 : index
    %c0_32 = arith.constant 0 : index
    %55 = vector.load %arg10[%c56, %c0_32] : memref<64x32xf32, #tpu.memory_space<vmem>>, vector<8x32xf32>
    tpu.vector_store %arg10[%c56, %c0_32], %54 {strides = array<i32>} : memref<64x32xf32, #tpu.memory_space<vmem>>, vector<8x32xf32>,
    %c0_33 = arith.constant 0 : index
    %c0_34 = arith.constant 0 : index
    %56 = vector.load %arg10[%c0_33, %c0_34] : memref<64x32xf32, #tpu.memory_space<vmem>>, vector<64x32xf32>
    %c0_35 = arith.constant 0 : index
    %c0_36 = arith.constant 0 : index
    %57 = vector.load %arg4[%c0_35, %c0_36] : memref<32x32xf32, #tpu.memory_space<vmem>>, vector<32x32xf32>
    %cst_37 = arith.constant dense<0.000000e+00> : vector<64x32xf32>
    %58 = tpu.matmul %56, %57, %cst_37 {dimension_numbers = #tpu.dot_dimension_numbers<[1], [0], [0], [1], [0, 0, 1, 1], [], []>} : vector<64x32xf32>, vector<32x32xf32>, vector<64x32xf32> -> vector<64x32xf32>
    %c0_38 = arith.constant 0 : index
    %c0_39 = arith.constant 0 : index
    %59 = vector.load %arg6[%c0_38, %c0_39] : memref<1x32xf32, #tpu.memory_space<vmem>>, vector<1x32xf32>
    %60 = vector.broadcast %59 : vector<1x32xf32> to vector<64x32xf32>
    %61 = arith.addf %58, %60 : vector<64x32xf32>
    %c0_40 = arith.constant 0 : index
    %c0_41 = arith.constant 0 : index
    %62 = vector.load %arg5[%c0_40, %c0_41] : memref<32x32xf32, #tpu.memory_space<vmem>>, vector<32x32xf32>
    %cst_42 = arith.constant 0.000000e+00 : f32
    %63 = vector.broadcast %cst_42 : f32 to vector<8x32xf32>
    %64 = vector.extract_strided_slice %61 {offsets = [0, 0], sizes = [8, 32], strides = [1, 1]} : vector<64x32xf32> to vector<8x32xf32>
    %cst_43 = arith.constant dense<0.000000e+00> : vector<8x32xf32>
    %65 = tpu.matmul %63, %62, %cst_43 {dimension_numbers = #tpu.dot_dimension_numbers<[1], [0], [0], [1], [0, 0, 1, 1], [], []>} : vector<8x32xf32>, vector<32x32xf32>, vector<8x32xf32> -> vector<8x32xf32>
    %66 = arith.addf %64, %65 : vector<8x32xf32>
    %cst_44 = arith.constant 0.000000e+00 : f32
    %67 = vector.broadcast %cst_44 : f32 to vector<8x32xf32>
    %68 = arith.maximumf %66, %67 : vector<8x32xf32>
    %69 = vector.extract_strided_slice %61 {offsets = [8, 0], sizes = [8, 32], strides = [1, 1]} : vector<64x32xf32> to vector<8x32xf32>
    %cst_45 = arith.constant dense<0.000000e+00> : vector<8x32xf32>
    %70 = tpu.matmul %68, %62, %cst_45 {dimension_numbers = #tpu.dot_dimension_numbers<[1], [0], [0], [1], [0, 0, 1, 1], [], []>} : vector<8x32xf32>, vector<32x32xf32>, vector<8x32xf32> -> vector<8x32xf32>
    %71 = arith.addf %69, %70 : vector<8x32xf32>
    %cst_46 = arith.constant 0.000000e+00 : f32
    %72 = vector.broadcast %cst_46 : f32 to vector<8x32xf32>
    %73 = arith.maximumf %71, %72 : vector<8x32xf32>
    %74 = vector.extract_strided_slice %61 {offsets = [16, 0], sizes = [8, 32], strides = [1, 1]} : vector<64x32xf32> to vector<8x32xf32>
    %cst_47 = arith.constant dense<0.000000e+00> : vector<8x32xf32>
    %75 = tpu.matmul %73, %62, %cst_47 {dimension_numbers = #tpu.dot_dimension_numbers<[1], [0], [0], [1], [0, 0, 1, 1], [], []>} : vector<8x32xf32>, vector<32x32xf32>, vector<8x32xf32> -> vector<8x32xf32>
    %76 = arith.addf %74, %75 : vector<8x32xf32>
    %cst_48 = arith.constant 0.000000e+00 : f32
    %77 = vector.broadcast %cst_48 : f32 to vector<8x32xf32>
    %78 = arith.maximumf %76, %77 : vector<8x32xf32>
    %79 = vector.extract_strided_slice %61 {offsets = [24, 0], sizes = [8, 32], strides = [1, 1]} : vector<64x32xf32> to vector<8x32xf32>
    %cst_49 = arith.constant dense<0.000000e+00> : vector<8x32xf32>
    %80 = tpu.matmul %78, %62, %cst_49 {dimension_numbers = #tpu.dot_dimension_numbers<[1], [0], [0], [1], [0, 0, 1, 1], [], []>} : vector<8x32xf32>, vector<32x32xf32>, vector<8x32xf32> -> vector<8x32xf32>
    %81 = arith.addf %79, %80 : vector<8x32xf32>
    %cst_50 = arith.constant 0.000000e+00 : f32
    %82 = vector.broadcast %cst_50 : f32 to vector<8x32xf32>
    %83 = arith.maximumf %81, %82 : vector<8x32xf32>
    %84 = vector.extract_strided_slice %61 {offsets = [32, 0], sizes = [8, 32], strides = [1, 1]} : vector<64x32xf32> to vector<8x32xf32>
    %cst_51 = arith.constant dense<0.000000e+00> : vector<8x32xf32>
    %85 = tpu.matmul %83, %62, %cst_51 {dimension_numbers = #tpu.dot_dimension_numbers<[1], [0], [0], [1], [0, 0, 1, 1], [], []>} : vector<8x32xf32>, vector<32x32xf32>, vector<8x32xf32> -> vector<8x32xf32>
    %86 = arith.addf %84, %85 : vector<8x32xf32>
    %cst_52 = arith.constant 0.000000e+00 : f32
    %87 = vector.broadcast %cst_52 : f32 to vector<8x32xf32>
    %88 = arith.maximumf %86, %87 : vector<8x32xf32>
    %89 = vector.extract_strided_slice %61 {offsets = [40, 0], sizes = [8, 32], strides = [1, 1]} : vector<64x32xf32> to vector<8x32xf32>
    %cst_53 = arith.constant dense<0.000000e+00> : vector<8x32xf32>
    %90 = tpu.matmul %88, %62, %cst_53 {dimension_numbers = #tpu.dot_dimension_numbers<[1], [0], [0], [1], [0, 0, 1, 1], [], []>} : vector<8x32xf32>, vector<32x32xf32>, vector<8x32xf32> -> vector<8x32xf32>
    %91 = arith.addf %89, %90 : vector<8x32xf32>
    %cst_54 = arith.constant 0.000000e+00 : f32
    %92 = vector.broadcast %cst_54 : f32 to vector<8x32xf32>
    %93 = arith.maximumf %91, %92 : vector<8x32xf32>
    %94 = vector.extract_strided_slice %61 {offsets = [48, 0], sizes = [8, 32], strides = [1, 1]} : vector<64x32xf32> to vector<8x32xf32>
    %cst_55 = arith.constant dense<0.000000e+00> : vector<8x32xf32>
    %95 = tpu.matmul %93, %62, %cst_55 {dimension_numbers = #tpu.dot_dimension_numbers<[1], [0], [0], [1], [0, 0, 1, 1], [], []>} : vector<8x32xf32>, vector<32x32xf32>, vector<8x32xf32> -> vector<8x32xf32>
    %96 = arith.addf %94, %95 : vector<8x32xf32>
    %cst_56 = arith.constant 0.000000e+00 : f32
    %97 = vector.broadcast %cst_56 : f32 to vector<8x32xf32>
    %98 = arith.maximumf %96, %97 : vector<8x32xf32>
    %99 = vector.extract_strided_slice %61 {offsets = [56, 0], sizes = [8, 32], strides = [1, 1]} : vector<64x32xf32> to vector<8x32xf32>
    %cst_57 = arith.constant dense<0.000000e+00> : vector<8x32xf32>
    %100 = tpu.matmul %98, %62, %cst_57 {dimension_numbers = #tpu.dot_dimension_numbers<[1], [0], [0], [1], [0, 0, 1, 1], [], []>} : vector<8x32xf32>, vector<32x32xf32>, vector<8x32xf32> -> vector<8x32xf32>
    %101 = arith.addf %99, %100 : vector<8x32xf32>
    %cst_58 = arith.constant 0.000000e+00 : f32
    %102 = vector.broadcast %cst_58 : f32 to vector<8x32xf32>
    %103 = arith.maximumf %101, %102 : vector<8x32xf32>
    %c0_59 = arith.constant 0 : index
    %c0_60 = arith.constant 0 : index
    %104 = vector.load %arg7[%c0_59, %c0_60] : memref<32x128xf32, #tpu.memory_space<vmem>>, vector<32x128xf32>
    %cst_61 = arith.constant dense<0.000000e+00> : vector<8x128xf32>
    %105 = tpu.matmul %103, %104, %cst_61 {dimension_numbers = #tpu.dot_dimension_numbers<[1], [0], [0], [1], [0, 0, 1, 1], [], []>} : vector<8x32xf32>, vector<32x128xf32>, vector<8x128xf32> -> vector<8x128xf32>
    %c0_62 = arith.constant 0 : index
    %c0_63 = arith.constant 0 : index
    %106 = vector.load %arg8[%c0_62, %c0_63] : memref<1x128xf32, #tpu.memory_space<vmem>>, vector<1x128xf32>
    %107 = vector.broadcast %106 : vector<1x128xf32> to vector<8x128xf32>
    %108 = arith.addf %105, %107 : vector<8x128xf32>
    %c0_64 = arith.constant 0 : index
    %c0_65 = arith.constant 0 : index
    %109 = vector.load %arg9[%c0_64, %c0_65] : memref<8x128xf32, #tpu.memory_space<vmem>>, vector<8x128xf32>
    tpu.vector_store %arg9[%c0_64, %c0_65], %108 {strides = array<i32>} : memref<8x128xf32, #tpu.memory_space<vmem>>, vector<8x128xf32>,
    return
  }
}

</mosaic_0001>

<llo_original>
// kernel: rnn_model_forward.1
$region0: #{rnn_model_forward.1}
  #allocation0 [shape = 'u32[]', space=smem, size = 0x4, offset = 0x4, fixed_abs, tag = 'smem constant byte address 0x4 - core index']
  #allocation1 [shape = 'u32[144,128]{1,0:T(1,128)}', space=vmem, size = 0x12000, scoped, tag = 'internal scratch']
  #allocation2 [shape = 'f32[64,32]{1,0:T(8,128)}', space=vmem, size = 0x8000, scoped, tag = 'scratch operand']
  %s0 = inlined_call_operand.vmem [shape: f32[64,16], index: 0, kind: input, shape index: {}]
  %s1 = inlined_call_operand.vmem [shape: f32[16,32], index: 1, kind: input, shape index: {}]
  %s2 = inlined_call_operand.vmem [shape: f32[32,32], index: 2, kind: input, shape index: {}]
  %s3 = inlined_call_operand.vmem [shape: f32[1,32], index: 3, kind: input, shape index: {}]
  %s4 = inlined_call_operand.vmem [shape: f32[32,32], index: 4, kind: input, shape index: {}]
  %s5 = inlined_call_operand.vmem [shape: f32[32,32], index: 5, kind: input, shape index: {}]
  %s6 = inlined_call_operand.vmem [shape: f32[1,32], index: 6, kind: input, shape index: {}]
  %s7 = inlined_call_operand.vmem [shape: f32[32,128], index: 7, kind: input, shape index: {}]
  %s8 = inlined_call_operand.vmem [shape: f32[1,128], index: 8, kind: input, shape index: {}]
  %s9 = inlined_call_operand.hbm [shape: f32[8,128], index: 9, kind: output, shape index: {}]
  %s10 = sld [smem:[#allocation0]]
  $region46: #{rnn_model_forward.1} parent=0
    _
  %s12 = ssub.s32 1, %s10
  %s13 = scalar_select 0, %s12, %s10
  $region1: #{rnn_model_forward.1} parent=0
    #allocation3 [shape = 'u8[4096]{0}', space=vmem, size = 0x1000, scoped, tag = 'output window, operand 0, single buffered']
    #allocation4 [shape = 's32[1]{0}', space=sflag, size = 0x4, scoped, tag = 'scoped memory for rnn_model_forward.1']
    %14 = vsyncpa [#allocation4], 0
    // Predicated region
    $region2: #{rnn_model_forward.1} parent=1 // pred_check
      _
    $region3: #{rnn_model_forward.1} parent=1 // pred_check_branch
      %16 = sbr.rel (0) target = $region5
    $region4: #{rnn_model_forward.1} parent=1 // pred_region
      _
    $region5: #{rnn_model_forward.1} parent=1 // pred_fallthru
      _
    // Predicated region
    $region6: #{rnn_model_forward.1} parent=1 // pred_check
      _
    $region7: #{rnn_model_forward.1} parent=1 // pred_check_branch
      %18 = sbr.rel (0) target = $region9
    $region8: #{rnn_model_forward.1} parent=1 // pred_region
      _
    $region9: #{rnn_model_forward.1} parent=1 // pred_fallthru
      _
    // Predicated region
    $region10: #{rnn_model_forward.1} parent=1 // pred_check
      _
    $region11: #{rnn_model_forward.1} parent=1 // pred_check_branch
      %20 = sbr.rel (0) target = $region13
    $region12: #{rnn_model_forward.1} parent=1 // pred_region
      _
    $region13: #{rnn_model_forward.1} parent=1 // pred_fallthru
      _
    // Predicated region
    $region14: #{rnn_model_forward.1} parent=1 // pred_check
      _
    $region15: #{rnn_model_forward.1} parent=1 // pred_check_branch
      %22 = sbr.rel (0) target = $region17
    $region16: #{rnn_model_forward.1} parent=1 // pred_region
      _
    $region17: #{rnn_model_forward.1} parent=1 // pred_fallthru
      _
    // Predicated region
    $region18: #{rnn_model_forward.1} parent=1 // pred_check
      _
    $region19: #{rnn_model_forward.1} parent=1 // pred_check_branch
      %24 = sbr.rel (0) target = $region21
    $region20: #{rnn_model_forward.1} parent=1 // pred_region
      _
    $region21: #{rnn_model_forward.1} parent=1 // pred_fallthru
      _
    // Predicated region
    $region22: #{rnn_model_forward.1} parent=1 // pred_check
      _
    $region23: #{rnn_model_forward.1} parent=1 // pred_check_branch
      %26 = sbr.rel (0) target = $region25
    $region24: #{rnn_model_forward.1} parent=1 // pred_region
      _
    $region25: #{rnn_model_forward.1} parent=1 // pred_fallthru
      _
    // Predicated region
    $region26: #{rnn_model_forward.1} parent=1 // pred_check
      _
    $region27: #{rnn_model_forward.1} parent=1 // pred_check_branch
      %28 = sbr.rel (0) target = $region29
    $region28: #{rnn_model_forward.1} parent=1 // pred_region
      _
    $region29: #{rnn_model_forward.1} parent=1 // pred_fallthru
      _
    // Predicated region
    $region30: #{rnn_model_forward.1} parent=1 // pred_check
      _
    $region31: #{rnn_model_forward.1} parent=1 // pred_check_branch
      %30 = sbr.rel (0) target = $region33
    $region32: #{rnn_model_forward.1} parent=1 // pred_region
      _
    $region33: #{rnn_model_forward.1} parent=1 // pred_fallthru
      _
    // Predicated region
    $region34: #{rnn_model_forward.1} parent=1 // pred_check
      _
    $region35: #{rnn_model_forward.1} parent=1 // pred_check_branch
      %32 = sbr.rel (0) target = $region37
    $region36: #{rnn_model_forward.1} parent=1 // pred_region
      _
    $region37: #{rnn_model_forward.1} parent=1 // pred_fallthru
      _
    %v33 = vld [vmem:[%s0] sm:$0xff]
    %v34 = vld [vmem:[%s0 + $0x8] sm:$0xff]
    %v35 = vld [vmem:[%s0 + $0x10] sm:$0xff]
    %v36 = vld [vmem:[%s0 + $0x18] sm:$0xff]
    %v37 = vld [vmem:[%s0 + $0x20] sm:$0xff]
    %v38 = vld [vmem:[%s0 + $0x28] sm:$0xff]
    %v39 = vld [vmem:[%s0 + $0x30] sm:$0xff]
    %v40 = vld [vmem:[%s0 + $0x38] sm:$0xff]
    %v41 = vld [vmem:[%s1] sm:$0xff]
    %v42 = vld [vmem:[%s1 + $0x8] sm:$0xff]
    %v43 = vld [vmem:[%s3] sm:$0x1]
    %v45 = vlaneseq
    %v46 = vshrl.u32 %v45, 7
    %v47 = vsub.s32 0, %v46
    %v48 = vrot.slane %v43, %v47
    %vm50 = vcmask 130048
    %v52 = vsel %vm50, %v33, 0
    %v55 = vsel %vm50, %v34, 0
    %v58 = vsel %vm50, %v35, 0
    %v61 = vsel %vm50, %v36, 0
    %v64 = vsel %vm50, %v37, 0
    %v67 = vsel %vm50, %v38, 0
    %v70 = vsel %vm50, %v39, 0
    %v73 = vsel %vm50, %v40, 0
    %75 = vmatprep.subr.mxu0 0.0
    %76 = vmatpush1.msra.mxu0 %v41
    %77 = vmatprep.subr.mxu0 0.0
    %78 = vmatpush1.msra.mxu0 %v42
    %79 = vmatprep.subr.mxu0 0.0
    %80 = vmatpush1.msra.mxu0 0.0
    %81 = vmatprep.subr.mxu0 0.0
    %82 = vmatpush1.msra.mxu0 0.0
    %83 = vmatprep.subr.mxu0 0.0
    %84 = vmatpush1.msra.mxu0 0.0
    %85 = vmatprep.subr.mxu0 0.0
    %86 = vmatpush1.msra.mxu0 0.0
    %87 = vmatprep.subr.mxu0 0.0
    %88 = vmatpush1.msra.mxu0 0.0
    %89 = vmatprep.subr.mxu0 0.0
    %90 = vmatpush1.msra.mxu0 0.0
    %91 = vmatprep.subr.mxu0 0.0
    %92 = vmatpush1.msra.mxu0 0.0
    %93 = vmatprep.subr.mxu0 0.0
    %94 = vmatpush1.msra.mxu0 0.0
    %95 = vmatprep.subr.mxu0 0.0
    %96 = vmatpush1.msra.mxu0 0.0
    %97 = vmatprep.subr.mxu0 0.0
    %98 = vmatpush1.msra.mxu0 0.0
    %99 = vmatprep.subr.mxu0 0.0
    %100 = vmatpush1.msra.mxu0 0.0
    %101 = vmatprep.subr.mxu0 0.0
    %102 = vmatpush1.msra.mxu0 0.0
    %103 = vmatprep.subr.mxu0 0.0
    %104 = vmatpush1.msra.mxu0 0.0
    %105 = vmatprep.subr.mxu0 0.0
    %106 = vmatpush1.msra.mxu0 0.0
    %107 = vmatprep.subr.mxu0 0.0
    %108 = vmatpush1.msra.mxu0 0.0
    %109 = vmatprep.subr.mxu0 0.0
    %110 = vmatpush1.msra.mxu0 0.0
    %111 = vmatprep.subr.mxu0 0.0
    %112 = vmatpush1.msra.mxu0 0.0
    %113 = vmatprep.subr.mxu0 0.0
    %114 = vmatpush1.msra.mxu0 0.0
    %115 = vmatprep.subr.mxu0 0.0
    %116 = vmatpush1.msra.mxu0 0.0
    %117 = vmatprep.subr.mxu0 0.0
    %118 = vmatpush1.msra.mxu0 0.0
    %119 = vmatprep.subr.mxu0 0.0
    %120 = vmatpush1.msra.mxu0 0.0
    %121 = vmatprep.subr.mxu0 0.0
    %122 = vmatpush1.msra.mxu0 0.0
    %123 = vmatprep.subr.mxu0 0.0
    %124 = vmatpush1.msra.mxu0 0.0
    %125 = vmatprep.subr.mxu0 0.0
    %126 = vmatpush1.msra.mxu0 0.0
    %127 = vmatprep.subr.mxu0 0.0
    %128 = vmatpush1.msra.mxu0 0.0
    %129 = vmatprep.subr.mxu0 0.0
    %130 = vmatpush1.msra.mxu0 0.0
    %131 = vmatprep.subr.mxu0 0.0
    %132 = vmatpush1.msra.mxu0 0.0
    %133 = vmatprep.subr.mxu0 0.0
    %134 = vmatpush1.msra.mxu0 0.0
    %135 = vmatprep.subr.mxu0 0.0
    %136 = vmatpush1.msra.mxu0 0.0
    %137 = vmatprep.subr.mxu0 0.0
    %138 = vmatpush1.msra.mxu0 0.0
    %139 = vmatprep.mubr.f32.mxu0 0.0
    %140 = vmatmul.mubr.f32.gmra.mrb[0].mxu0 %v52
    %v141 = vpop.f32.mrb[0].mxu0
    %v142 = vadd.f32 %v48, %v141
    %v143 = vpop.f32.mrb[0].mxu0
    %144 = vmatprep.mubr.f32.mxu0 0.0
    %145 = vmatmul.mubr.f32.gmra.mrb[0].mxu0 %v55
    %v146 = vpop.f32.mrb[0].mxu0
    %v147 = vadd.f32 %v48, %v146
    %v148 = vpop.f32.mrb[0].mxu0
    %149 = vmatprep.mubr.f32.mxu0 0.0
    %150 = vmatmul.mubr.f32.gmra.mrb[0].mxu0 %v58
    %v151 = vpop.f32.mrb[0].mxu0
    %v152 = vadd.f32 %v48, %v151
    %v153 = vpop.f32.mrb[0].mxu0
    %154 = vmatprep.mubr.f32.mxu0 0.0
    %155 = vmatmul.mubr.f32.gmra.mrb[0].mxu0 %v61
    %v156 = vpop.f32.mrb[0].mxu0
    %v157 = vadd.f32 %v48, %v156
    %v158 = vpop.f32.mrb[0].mxu0
    %159 = vmatprep.mubr.f32.mxu0 0.0
    %160 = vmatmul.mubr.f32.gmra.mrb[0].mxu0 %v64
    %v161 = vpop.f32.mrb[0].mxu0
    %v162 = vadd.f32 %v48, %v161
    %v163 = vpop.f32.mrb[0].mxu0
    %164 = vmatprep.mubr.f32.mxu0 0.0
    %165 = vmatmul.mubr.f32.gmra.mrb[0].mxu0 %v67
    %v166 = vpop.f32.mrb[0].mxu0
    %v167 = vadd.f32 %v48, %v166
    %v168 = vpop.f32.mrb[0].mxu0
    %169 = vmatprep.mubr.f32.mxu0 0.0
    %170 = vmatmul.mubr.f32.gmra.mrb[0].mxu0 %v70
    %v171 = vpop.f32.mrb[0].mxu0
    %v172 = vadd.f32 %v48, %v171
    %v173 = vpop.f32.mrb[0].mxu0
    %174 = vmatprep.mubr.f32.mxu0 0.0
    %175 = vmatmul.mubr.f32.gmra.mrb[0].mxu0 %v73
    %v176 = vpop.f32.mrb[0].mxu0
    %v177 = vadd.f32 %v48, %v176
    %v178 = vpop.f32.mrb[0].mxu0
    %179 = vdwg.mxu0
    %v180 = vld [vmem:[%s2] sm:$0xff]
    %v181 = vld [vmem:[%s2 + $0x8] sm:$0xff]
    %v182 = vld [vmem:[%s2 + $0x10] sm:$0xff]
    %v183 = vld [vmem:[%s2 + $0x18] sm:$0xff]
    %vm184 = vcmask 261120
    %v186 = vsel %vm184, 0.0, 0
    %188 = vmatprep.subr.mxu0 0.0
    %189 = vmatpush1.msra.mxu0 %v180
    %190 = vmatprep.subr.mxu0 0.0
    %191 = vmatpush1.msra.mxu0 %v181
    %192 = vmatprep.subr.mxu0 0.0
    %193 = vmatpush1.msra.mxu0 %v182
    %194 = vmatprep.subr.mxu0 0.0
    %195 = vmatpush1.msra.mxu0 %v183
    %196 = vmatprep.subr.mxu0 0.0
    %197 = vmatpush1.msra.mxu0 0.0
    %198 = vmatprep.subr.mxu0 0.0
    %199 = vmatpush1.msra.mxu0 0.0
    %200 = vmatprep.subr.mxu0 0.0
    %201 = vmatpush1.msra.mxu0 0.0
    %202 = vmatprep.subr.mxu0 0.0
    %203 = vmatpush1.msra.mxu0 0.0
    %204 = vmatprep.subr.mxu0 0.0
    %205 = vmatpush1.msra.mxu0 0.0
    %206 = vmatprep.subr.mxu0 0.0
    %207 = vmatpush1.msra.mxu0 0.0
    %208 = vmatprep.subr.mxu0 0.0
    %209 = vmatpush1.msra.mxu0 0.0
    %210 = vmatprep.subr.mxu0 0.0
    %211 = vmatpush1.msra.mxu0 0.0
    %212 = vmatprep.subr.mxu0 0.0
    %213 = vmatpush1.msra.mxu0 0.0
    %214 = vmatprep.subr.mxu0 0.0
    %215 = vmatpush1.msra.mxu0 0.0
    %216 = vmatprep.subr.mxu0 0.0
    %217 = vmatpush1.msra.mxu0 0.0
    %218 = vmatprep.subr.mxu0 0.0
    %219 = vmatpush1.msra.mxu0 0.0
    %220 = vmatprep.subr.mxu0 0.0
    %221 = vmatpush1.msra.mxu0 0.0
    %222 = vmatprep.subr.mxu0 0.0
    %223 = vmatpush1.msra.mxu0 0.0
    %224 = vmatprep.subr.mxu0 0.0
    %225 = vmatpush1.msra.mxu0 0.0
    %226 = vmatprep.subr.mxu0 0.0
    %227 = vmatpush1.msra.mxu0 0.0
    %228 = vmatprep.subr.mxu0 0.0
    %229 = vmatpush1.msra.mxu0 0.0
    %230 = vmatprep.subr.mxu0 0.0
    %231 = vmatpush1.msra.mxu0 0.0
    %232 = vmatprep.subr.mxu0 0.0
    %233 = vmatpush1.msra.mxu0 0.0
    %234 = vmatprep.subr.mxu0 0.0
    %235 = vmatpush1.msra.mxu0 0.0
    %236 = vmatprep.subr.mxu0 0.0
    %237 = vmatpush1.msra.mxu0 0.0
    %238 = vmatprep.subr.mxu0 0.0
    %239 = vmatpush1.msra.mxu0 0.0
    %240 = vmatprep.subr.mxu0 0.0
    %241 = vmatpush1.msra.mxu0 0.0
    %242 = vmatprep.subr.mxu0 0.0
    %243 = vmatpush1.msra.mxu0 0.0
    %244 = vmatprep.subr.mxu0 0.0
    %245 = vmatpush1.msra.mxu0 0.0
    %246 = vmatprep.subr.mxu0 0.0
    %247 = vmatpush1.msra.mxu0 0.0
    %248 = vmatprep.subr.mxu0 0.0
    %249 = vmatpush1.msra.mxu0 0.0
    %250 = vmatprep.subr.mxu0 0.0
    %251 = vmatpush1.msra.mxu0 0.0
    %252 = vmatprep.mubr.f32.mxu0 0.0
    %253 = vmatmul.mubr.f32.gmra.mrb[0].mxu0 %v186
    %v254 = vpop.f32.mrb[0].mxu0
    %v255 = vadd.f32 0.0, %v254
    %v256 = vpop.f32.mrb[0].mxu0
    %257 = vdwg.mxu0
    %v258 = vadd.f32 %v142, %v255
    %v259 = vmax.f32 %v258, 0.0
    %260 = vst.msk [vmem:[#allocation2] sm:$0xff] %vm184, %v259
    %v262 = vsel %vm184, %v259, 0
    %264 = vmatprep.subr.mxu0 0.0
    %265 = vmatpush1.msra.mxu0 %v180
    %266 = vmatprep.subr.mxu0 0.0
    %267 = vmatpush1.msra.mxu0 %v181
    %268 = vmatprep.subr.mxu0 0.0
    %269 = vmatpush1.msra.mxu0 %v182
    %270 = vmatprep.subr.mxu0 0.0
    %271 = vmatpush1.msra.mxu0 %v183
    %272 = vmatprep.subr.mxu0 0.0
    %273 = vmatpush1.msra.mxu0 0.0
    %274 = vmatprep.subr.mxu0 0.0
    %275 = vmatpush1.msra.mxu0 0.0
    %276 = vmatprep.subr.mxu0 0.0
    %277 = vmatpush1.msra.mxu0 0.0
    %278 = vmatprep.subr.mxu0 0.0
    %279 = vmatpush1.msra.mxu0 0.0
    %280 = vmatprep.subr.mxu0 0.0
    %281 = vmatpush1.msra.mxu0 0.0
    %282 = vmatprep.subr.mxu0 0.0
    %283 = vmatpush1.msra.mxu0 0.0
    %284 = vmatprep.subr.mxu0 0.0
    %285 = vmatpush1.msra.mxu0 0.0
    %286 = vmatprep.subr.mxu0 0.0
    %287 = vmatpush1.msra.mxu0 0.0
    %288 = vmatprep.subr.mxu0 0.0
    %289 = vmatpush1.msra.mxu0 0.0
    %290 = vmatprep.subr.mxu0 0.0
    %291 = vmatpush1.msra.mxu0 0.0
    %292 = vmatprep.subr.mxu0 0.0
    %293 = vmatpush1.msra.mxu0 0.0
    %294 = vmatprep.subr.mxu0 0.0
    %295 = vmatpush1.msra.mxu0 0.0
    %296 = vmatprep.subr.mxu0 0.0
    %297 = vmatpush1.msra.mxu0 0.0
    %298 = vmatprep.subr.mxu0 0.0
    %299 = vmatpush1.msra.mxu0 0.0
    %300 = vmatprep.subr.mxu0 0.0
    %301 = vmatpush1.msra.mxu0 0.0
    %302 = vmatprep.subr.mxu0 0.0
    %303 = vmatpush1.msra.mxu0 0.0
    %304 = vmatprep.subr.mxu0 0.0
    %305 = vmatpush1.msra.mxu0 0.0
    %306 = vmatprep.subr.mxu0 0.0
    %307 = vmatpush1.msra.mxu0 0.0
    %308 = vmatprep.subr.mxu0 0.0
    %309 = vmatpush1.msra.mxu0 0.0
    %310 = vmatprep.subr.mxu0 0.0
    %311 = vmatpush1.msra.mxu0 0.0
    %312 = vmatprep.subr.mxu0 0.0
    %313 = vmatpush1.msra.mxu0 0.0
    %314 = vmatprep.subr.mxu0 0.0
    %315 = vmatpush1.msra.mxu0 0.0
    %316 = vmatprep.subr.mxu0 0.0
    %317 = vmatpush1.msra.mxu0 0.0
    %318 = vmatprep.subr.mxu0 0.0
    %319 = vmatpush1.msra.mxu0 0.0
    %320 = vmatprep.subr.mxu0 0.0
    %321 = vmatpush1.msra.mxu0 0.0
    %322 = vmatprep.subr.mxu0 0.0
    %323 = vmatpush1.msra.mxu0 0.0
    %324 = vmatprep.subr.mxu0 0.0
    %325 = vmatpush1.msra.mxu0 0.0
    %326 = vmatprep.subr.mxu0 0.0
    %327 = vmatpush1.msra.mxu0 0.0
    %328 = vmatprep.mubr.f32.mxu0 0.0
    %329 = vmatmul.mubr.f32.gmra.mrb[0].mxu0 %v262
    %v330 = vpop.f32.mrb[0].mxu0
    %v331 = vadd.f32 0.0, %v330
    %v332 = vpop.f32.mrb[0].mxu0
    %333 = vdwg.mxu0
    %v334 = vadd.f32 %v147, %v331
    %v335 = vmax.f32 %v334, 0.0
    %336 = vst.msk [vmem:[#allocation2 + $0x8] sm:$0xff] %vm184, %v335
    %v338 = vsel %vm184, %v335, 0
    %340 = vmatprep.subr.mxu0 0.0
    %341 = vmatpush1.msra.mxu0 %v180
    %342 = vmatprep.subr.mxu0 0.0
    %343 = vmatpush1.msra.mxu0 %v181
    %344 = vmatprep.subr.mxu0 0.0
    %345 = vmatpush1.msra.mxu0 %v182
    %346 = vmatprep.subr.mxu0 0.0
    %347 = vmatpush1.msra.mxu0 %v183
    %348 = vmatprep.subr.mxu0 0.0
    %349 = vmatpush1.msra.mxu0 0.0
    %350 = vmatprep.subr.mxu0 0.0
    %351 = vmatpush1.msra.mxu0 0.0
    %352 = vmatprep.subr.mxu0 0.0
    %353 = vmatpush1.msra.mxu0 0.0
    %354 = vmatprep.subr.mxu0 0.0
    %355 = vmatpush1.msra.mxu0 0.0
    %356 = vmatprep.subr.mxu0 0.0
    %357 = vmatpush1.msra.mxu0 0.0
    %358 = vmatprep.subr.mxu0 0.0
    %359 = vmatpush1.msra.mxu0 0.0
    %360 = vmatprep.subr.mxu0 0.0
    %361 = vmatpush1.msra.mxu0 0.0
    %362 = vmatprep.subr.mxu0 0.0
    %363 = vmatpush1.msra.mxu0 0.0
    %364 = vmatprep.subr.mxu0 0.0
    %365 = vmatpush1.msra.mxu0 0.0
    %366 = vmatprep.subr.mxu0 0.0
    %367 = vmatpush1.msra.mxu0 0.0
    %368 = vmatprep.subr.mxu0 0.0
    %369 = vmatpush1.msra.mxu0 0.0
    %370 = vmatprep.subr.mxu0 0.0
    %371 = vmatpush1.msra.mxu0 0.0
    %372 = vmatprep.subr.mxu0 0.0
    %373 = vmatpush1.msra.mxu0 0.0
    %374 = vmatprep.subr.mxu0 0.0
    %375 = vmatpush1.msra.mxu0 0.0
    %376 = vmatprep.subr.mxu0 0.0
    %377 = vmatpush1.msra.mxu0 0.0
    %378 = vmatprep.subr.mxu0 0.0
    %379 = vmatpush1.msra.mxu0 0.0
    %380 = vmatprep.subr.mxu0 0.0
    %381 = vmatpush1.msra.mxu0 0.0
    %382 = vmatprep.subr.mxu0 0.0
    %383 = vmatpush1.msra.mxu0 0.0
    %384 = vmatprep.subr.mxu0 0.0
    %385 = vmatpush1.msra.mxu0 0.0
    %386 = vmatprep.subr.mxu0 0.0
    %387 = vmatpush1.msra.mxu0 0.0
    %388 = vmatprep.subr.mxu0 0.0
    %389 = vmatpush1.msra.mxu0 0.0
    %390 = vmatprep.subr.mxu0 0.0
    %391 = vmatpush1.msra.mxu0 0.0
    %392 = vmatprep.subr.mxu0 0.0
    %393 = vmatpush1.msra.mxu0 0.0
    %394 = vmatprep.subr.mxu0 0.0
    %395 = vmatpush1.msra.mxu0 0.0
    %396 = vmatprep.subr.mxu0 0.0
    %397 = vmatpush1.msra.mxu0 0.0
    %398 = vmatprep.subr.mxu0 0.0
    %399 = vmatpush1.msra.mxu0 0.0
    %400 = vmatprep.subr.mxu0 0.0
    %401 = vmatpush1.msra.mxu0 0.0
    %402 = vmatprep.subr.mxu0 0.0
    %403 = vmatpush1.msra.mxu0 0.0
    %404 = vmatprep.mubr.f32.mxu0 0.0
    %405 = vmatmul.mubr.f32.gmra.mrb[0].mxu0 %v338
    %v406 = vpop.f32.mrb[0].mxu0
    %v407 = vadd.f32 0.0, %v406
    %v408 = vpop.f32.mrb[0].mxu0
    %409 = vdwg.mxu0
    %v410 = vadd.f32 %v152, %v407
    %v411 = vmax.f32 %v410, 0.0
    %412 = vst.msk [vmem:[#allocation2 + $0x10] sm:$0xff] %vm184, %v411
    %v414 = vsel %vm184, %v411, 0
    %416 = vmatprep.subr.mxu0 0.0
    %417 = vmatpush1.msra.mxu0 %v180
    %418 = vmatprep.subr.mxu0 0.0
    %419 = vmatpush1.msra.mxu0 %v181
    %420 = vmatprep.subr.mxu0 0.0
    %421 = vmatpush1.msra.mxu0 %v182
    %422 = vmatprep.subr.mxu0 0.0
    %423 = vmatpush1.msra.mxu0 %v183
    %424 = vmatprep.subr.mxu0 0.0
    %425 = vmatpush1.msra.mxu0 0.0
    %426 = vmatprep.subr.mxu0 0.0
    %427 = vmatpush1.msra.mxu0 0.0
    %428 = vmatprep.subr.mxu0 0.0
    %429 = vmatpush1.msra.mxu0 0.0
    %430 = vmatprep.subr.mxu0 0.0
    %431 = vmatpush1.msra.mxu0 0.0
    %432 = vmatprep.subr.mxu0 0.0
    %433 = vmatpush1.msra.mxu0 0.0
    %434 = vmatprep.subr.mxu0 0.0
    %435 = vmatpush1.msra.mxu0 0.0
    %436 = vmatprep.subr.mxu0 0.0
    %437 = vmatpush1.msra.mxu0 0.0
    %438 = vmatprep.subr.mxu0 0.0
    %439 = vmatpush1.msra.mxu0 0.0
    %440 = vmatprep.subr.mxu0 0.0
    %441 = vmatpush1.msra.mxu0 0.0
    %442 = vmatprep.subr.mxu0 0.0
    %443 = vmatpush1.msra.mxu0 0.0
    %444 = vmatprep.subr.mxu0 0.0
    %445 = vmatpush1.msra.mxu0 0.0
    %446 = vmatprep.subr.mxu0 0.0
    %447 = vmatpush1.msra.mxu0 0.0
    %448 = vmatprep.subr.mxu0 0.0
    %449 = vmatpush1.msra.mxu0 0.0
    %450 = vmatprep.subr.mxu0 0.0
    %451 = vmatpush1.msra.mxu0 0.0
    %452 = vmatprep.subr.mxu0 0.0
    %453 = vmatpush1.msra.mxu0 0.0
    %454 = vmatprep.subr.mxu0 0.0
    %455 = vmatpush1.msra.mxu0 0.0
    %456 = vmatprep.subr.mxu0 0.0
    %457 = vmatpush1.msra.mxu0 0.0
    %458 = vmatprep.subr.mxu0 0.0
    %459 = vmatpush1.msra.mxu0 0.0
    %460 = vmatprep.subr.mxu0 0.0
    %461 = vmatpush1.msra.mxu0 0.0
    %462 = vmatprep.subr.mxu0 0.0
    %463 = vmatpush1.msra.mxu0 0.0
    %464 = vmatprep.subr.mxu0 0.0
    %465 = vmatpush1.msra.mxu0 0.0
    %466 = vmatprep.subr.mxu0 0.0
    %467 = vmatpush1.msra.mxu0 0.0
    %468 = vmatprep.subr.mxu0 0.0
    %469 = vmatpush1.msra.mxu0 0.0
    %470 = vmatprep.subr.mxu0 0.0
    %471 = vmatpush1.msra.mxu0 0.0
    %472 = vmatprep.subr.mxu0 0.0
    %473 = vmatpush1.msra.mxu0 0.0
    %474 = vmatprep.subr.mxu0 0.0
    %475 = vmatpush1.msra.mxu0 0.0
    %476 = vmatprep.subr.mxu0 0.0
    %477 = vmatpush1.msra.mxu0 0.0
    %478 = vmatprep.subr.mxu0 0.0
    %479 = vmatpush1.msra.mxu0 0.0
    %480 = vmatprep.mubr.f32.mxu0 0.0
    %481 = vmatmul.mubr.f32.gmra.mrb[0].mxu0 %v414
    %v482 = vpop.f32.mrb[0].mxu0
    %v483 = vadd.f32 0.0, %v482
    %v484 = vpop.f32.mrb[0].mxu0
    %485 = vdwg.mxu0
    %v486 = vadd.f32 %v157, %v483
    %v487 = vmax.f32 %v486, 0.0
    %488 = vst.msk [vmem:[#allocation2 + $0x18] sm:$0xff] %vm184, %v487
    %v490 = vsel %vm184, %v487, 0
    %492 = vmatprep.subr.mxu0 0.0
    %493 = vmatpush1.msra.mxu0 %v180
    %494 = vmatprep.subr.mxu0 0.0
    %495 = vmatpush1.msra.mxu0 %v181
    %496 = vmatprep.subr.mxu0 0.0
    %497 = vmatpush1.msra.mxu0 %v182
    %498 = vmatprep.subr.mxu0 0.0
    %499 = vmatpush1.msra.mxu0 %v183
    %500 = vmatprep.subr.mxu0 0.0
    %501 = vmatpush1.msra.mxu0 0.0
    %502 = vmatprep.subr.mxu0 0.0
    %503 = vmatpush1.msra.mxu0 0.0
    %504 = vmatprep.subr.mxu0 0.0
    %505 = vmatpush1.msra.mxu0 0.0
    %506 = vmatprep.subr.mxu0 0.0
    %507 = vmatpush1.msra.mxu0 0.0
    %508 = vmatprep.subr.mxu0 0.0
    %509 = vmatpush1.msra.mxu0 0.0
    %510 = vmatprep.subr.mxu0 0.0
    %511 = vmatpush1.msra.mxu0 0.0
    %512 = vmatprep.subr.mxu0 0.0
    %513 = vmatpush1.msra.mxu0 0.0
    %514 = vmatprep.subr.mxu0 0.0
    %515 = vmatpush1.msra.mxu0 0.0
    %516 = vmatprep.subr.mxu0 0.0
    %517 = vmatpush1.msra.mxu0 0.0
    %518 = vmatprep.subr.mxu0 0.0
    %519 = vmatpush1.msra.mxu0 0.0
    %520 = vmatprep.subr.mxu0 0.0
    %521 = vmatpush1.msra.mxu0 0.0
    %522 = vmatprep.subr.mxu0 0.0
    %523 = vmatpush1.msra.mxu0 0.0
    %524 = vmatprep.subr.mxu0 0.0
    %525 = vmatpush1.msra.mxu0 0.0
    %526 = vmatprep.subr.mxu0 0.0
    %527 = vmatpush1.msra.mxu0 0.0
    %528 = vmatprep.subr.mxu0 0.0
    %529 = vmatpush1.msra.mxu0 0.0
    %530 = vmatprep.subr.mxu0 0.0
    %531 = vmatpush1.msra.mxu0 0.0
    %532 = vmatprep.subr.mxu0 0.0
    %533 = vmatpush1.msra.mxu0 0.0
    %534 = vmatprep.subr.mxu0 0.0
    %535 = vmatpush1.msra.mxu0 0.0
    %536 = vmatprep.subr.mxu0 0.0
    %537 = vmatpush1.msra.mxu0 0.0
    %538 = vmatprep.subr.mxu0 0.0
    %539 = vmatpush1.msra.mxu0 0.0
    %540 = vmatprep.subr.mxu0 0.0
    %541 = vmatpush1.msra.mxu0 0.0
    %542 = vmatprep.subr.mxu0 0.0
    %543 = vmatpush1.msra.mxu0 0.0
    %544 = vmatprep.subr.mxu0 0.0
    %545 = vmatpush1.msra.mxu0 0.0
    %546 = vmatprep.subr.mxu0 0.0
    %547 = vmatpush1.msra.mxu0 0.0
    %548 = vmatprep.subr.mxu0 0.0
    %549 = vmatpush1.msra.mxu0 0.0
    %550 = vmatprep.subr.mxu0 0.0
    %551 = vmatpush1.msra.mxu0 0.0
    %552 = vmatprep.subr.mxu0 0.0
    %553 = vmatpush1.msra.mxu0 0.0
    %554 = vmatprep.subr.mxu0 0.0
    %555 = vmatpush1.msra.mxu0 0.0
    %556 = vmatprep.mubr.f32.mxu0 0.0
    %557 = vmatmul.mubr.f32.gmra.mrb[0].mxu0 %v490
    %v558 = vpop.f32.mrb[0].mxu0
    %v559 = vadd.f32 0.0, %v558
    %v560 = vpop.f32.mrb[0].mxu0
    %561 = vdwg.mxu0
    %v562 = vadd.f32 %v162, %v559
    %v563 = vmax.f32 %v562, 0.0
    %564 = vst.msk [vmem:[#allocation2 + $0x20] sm:$0xff] %vm184, %v563
    %v566 = vsel %vm184, %v563, 0
    %568 = vmatprep.subr.mxu0 0.0
    %569 = vmatpush1.msra.mxu0 %v180
    %570 = vmatprep.subr.mxu0 0.0
    %571 = vmatpush1.msra.mxu0 %v181
    %572 = vmatprep.subr.mxu0 0.0
    %573 = vmatpush1.msra.mxu0 %v182
    %574 = vmatprep.subr.mxu0 0.0
    %575 = vmatpush1.msra.mxu0 %v183
    %576 = vmatprep.subr.mxu0 0.0
    %577 = vmatpush1.msra.mxu0 0.0
    %578 = vmatprep.subr.mxu0 0.0
    %579 = vmatpush1.msra.mxu0 0.0
    %580 = vmatprep.subr.mxu0 0.0
    %581 = vmatpush1.msra.mxu0 0.0
    %582 = vmatprep.subr.mxu0 0.0
    %583 = vmatpush1.msra.mxu0 0.0
    %584 = vmatprep.subr.mxu0 0.0
    %585 = vmatpush1.msra.mxu0 0.0
    %586 = vmatprep.subr.mxu0 0.0
    %587 = vmatpush1.msra.mxu0 0.0
    %588 = vmatprep.subr.mxu0 0.0
    %589 = vmatpush1.msra.mxu0 0.0
    %590 = vmatprep.subr.mxu0 0.0
    %591 = vmatpush1.msra.mxu0 0.0
    %592 = vmatprep.subr.mxu0 0.0
    %593 = vmatpush1.msra.mxu0 0.0
    %594 = vmatprep.subr.mxu0 0.0
    %595 = vmatpush1.msra.mxu0 0.0
    %596 = vmatprep.subr.mxu0 0.0
    %597 = vmatpush1.msra.mxu0 0.0
    %598 = vmatprep.subr.mxu0 0.0
    %599 = vmatpush1.msra.mxu0 0.0
    %600 = vmatprep.subr.mxu0 0.0
    %601 = vmatpush1.msra.mxu0 0.0
    %602 = vmatprep.subr.mxu0 0.0
    %603 = vmatpush1.msra.mxu0 0.0
    %604 = vmatprep.subr.mxu0 0.0
    %605 = vmatpush1.msra.mxu0 0.0
    %606 = vmatprep.subr.mxu0 0.0
    %607 = vmatpush1.msra.mxu0 0.0
    %608 = vmatprep.subr.mxu0 0.0
    %609 = vmatpush1.msra.mxu0 0.0
    %610 = vmatprep.subr.mxu0 0.0
    %611 = vmatpush1.msra.mxu0 0.0
    %612 = vmatprep.subr.mxu0 0.0
    %613 = vmatpush1.msra.mxu0 0.0
    %614 = vmatprep.subr.mxu0 0.0
    %615 = vmatpush1.msra.mxu0 0.0
    %616 = vmatprep.subr.mxu0 0.0
    %617 = vmatpush1.msra.mxu0 0.0
    %618 = vmatprep.subr.mxu0 0.0
    %619 = vmatpush1.msra.mxu0 0.0
    %620 = vmatprep.subr.mxu0 0.0
    %621 = vmatpush1.msra.mxu0 0.0
    %622 = vmatprep.subr.mxu0 0.0
    %623 = vmatpush1.msra.mxu0 0.0
    %624 = vmatprep.subr.mxu0 0.0
    %625 = vmatpush1.msra.mxu0 0.0
    %626 = vmatprep.subr.mxu0 0.0
    %627 = vmatpush1.msra.mxu0 0.0
    %628 = vmatprep.subr.mxu0 0.0
    %629 = vmatpush1.msra.mxu0 0.0
    %630 = vmatprep.subr.mxu0 0.0
    %631 = vmatpush1.msra.mxu0 0.0
    %632 = vmatprep.mubr.f32.mxu0 0.0
    %633 = vmatmul.mubr.f32.gmra.mrb[0].mxu0 %v566
    %v634 = vpop.f32.mrb[0].mxu0
    %v635 = vadd.f32 0.0, %v634
    %v636 = vpop.f32.mrb[0].mxu0
    %637 = vdwg.mxu0
    %v638 = vadd.f32 %v167, %v635
    %v639 = vmax.f32 %v638, 0.0
    %640 = vst.msk [vmem:[#allocation2 + $0x28] sm:$0xff] %vm184, %v639
    %v642 = vsel %vm184, %v639, 0
    %644 = vmatprep.subr.mxu0 0.0
    %645 = vmatpush1.msra.mxu0 %v180
    %646 = vmatprep.subr.mxu0 0.0
    %647 = vmatpush1.msra.mxu0 %v181
    %648 = vmatprep.subr.mxu0 0.0
    %649 = vmatpush1.msra.mxu0 %v182
    %650 = vmatprep.subr.mxu0 0.0
    %651 = vmatpush1.msra.mxu0 %v183
    %652 = vmatprep.subr.mxu0 0.0
    %653 = vmatpush1.msra.mxu0 0.0
    %654 = vmatprep.subr.mxu0 0.0
    %655 = vmatpush1.msra.mxu0 0.0
    %656 = vmatprep.subr.mxu0 0.0
    %657 = vmatpush1.msra.mxu0 0.0
    %658 = vmatprep.subr.mxu0 0.0
    %659 = vmatpush1.msra.mxu0 0.0
    %660 = vmatprep.subr.mxu0 0.0
    %661 = vmatpush1.msra.mxu0 0.0
    %662 = vmatprep.subr.mxu0 0.0
    %663 = vmatpush1.msra.mxu0 0.0
    %664 = vmatprep.subr.mxu0 0.0
    %665 = vmatpush1.msra.mxu0 0.0
    %666 = vmatprep.subr.mxu0 0.0
    %667 = vmatpush1.msra.mxu0 0.0
    %668 = vmatprep.subr.mxu0 0.0
    %669 = vmatpush1.msra.mxu0 0.0
    %670 = vmatprep.subr.mxu0 0.0
    %671 = vmatpush1.msra.mxu0 0.0
    %672 = vmatprep.subr.mxu0 0.0
    %673 = vmatpush1.msra.mxu0 0.0
    %674 = vmatprep.subr.mxu0 0.0
    %675 = vmatpush1.msra.mxu0 0.0
    %676 = vmatprep.subr.mxu0 0.0
    %677 = vmatpush1.msra.mxu0 0.0
    %678 = vmatprep.subr.mxu0 0.0
    %679 = vmatpush1.msra.mxu0 0.0
    %680 = vmatprep.subr.mxu0 0.0
    %681 = vmatpush1.msra.mxu0 0.0
    %682 = vmatprep.subr.mxu0 0.0
    %683 = vmatpush1.msra.mxu0 0.0
    %684 = vmatprep.subr.mxu0 0.0
    %685 = vmatpush1.msra.mxu0 0.0
    %686 = vmatprep.subr.mxu0 0.0
    %687 = vmatpush1.msra.mxu0 0.0
    %688 = vmatprep.subr.mxu0 0.0
    %689 = vmatpush1.msra.mxu0 0.0
    %690 = vmatprep.subr.mxu0 0.0
    %691 = vmatpush1.msra.mxu0 0.0
    %692 = vmatprep.subr.mxu0 0.0
    %693 = vmatpush1.msra.mxu0 0.0
    %694 = vmatprep.subr.mxu0 0.0
    %695 = vmatpush1.msra.mxu0 0.0
    %696 = vmatprep.subr.mxu0 0.0
    %697 = vmatpush1.msra.mxu0 0.0
    %698 = vmatprep.subr.mxu0 0.0
    %699 = vmatpush1.msra.mxu0 0.0
    %700 = vmatprep.subr.mxu0 0.0
    %701 = vmatpush1.msra.mxu0 0.0
    %702 = vmatprep.subr.mxu0 0.0
    %703 = vmatpush1.msra.mxu0 0.0
    %704 = vmatprep.subr.mxu0 0.0
    %705 = vmatpush1.msra.mxu0 0.0
    %706 = vmatprep.subr.mxu0 0.0
    %707 = vmatpush1.msra.mxu0 0.0
    %708 = vmatprep.mubr.f32.mxu0 0.0
    %709 = vmatmul.mubr.f32.gmra.mrb[0].mxu0 %v642
    %v710 = vpop.f32.mrb[0].mxu0
    %v711 = vadd.f32 0.0, %v710
    %v712 = vpop.f32.mrb[0].mxu0
    %713 = vdwg.mxu0
    %v714 = vadd.f32 %v172, %v711
    %v715 = vmax.f32 %v714, 0.0
    %716 = vst.msk [vmem:[#allocation2 + $0x30] sm:$0xff] %vm184, %v715
    %v718 = vsel %vm184, %v715, 0
    %720 = vmatprep.subr.mxu0 0.0
    %721 = vmatpush1.msra.mxu0 %v180
    %722 = vmatprep.subr.mxu0 0.0
    %723 = vmatpush1.msra.mxu0 %v181
    %724 = vmatprep.subr.mxu0 0.0
    %725 = vmatpush1.msra.mxu0 %v182
    %726 = vmatprep.subr.mxu0 0.0
    %727 = vmatpush1.msra.mxu0 %v183
    %728 = vmatprep.subr.mxu0 0.0
    %729 = vmatpush1.msra.mxu0 0.0
    %730 = vmatprep.subr.mxu0 0.0
    %731 = vmatpush1.msra.mxu0 0.0
    %732 = vmatprep.subr.mxu0 0.0
    %733 = vmatpush1.msra.mxu0 0.0
    %734 = vmatprep.subr.mxu0 0.0
    %735 = vmatpush1.msra.mxu0 0.0
    %736 = vmatprep.subr.mxu0 0.0
    %737 = vmatpush1.msra.mxu0 0.0
    %738 = vmatprep.subr.mxu0 0.0
    %739 = vmatpush1.msra.mxu0 0.0
    %740 = vmatprep.subr.mxu0 0.0
    %741 = vmatpush1.msra.mxu0 0.0
    %742 = vmatprep.subr.mxu0 0.0
    %743 = vmatpush1.msra.mxu0 0.0
    %744 = vmatprep.subr.mxu0 0.0
    %745 = vmatpush1.msra.mxu0 0.0
    %746 = vmatprep.subr.mxu0 0.0
    %747 = vmatpush1.msra.mxu0 0.0
    %748 = vmatprep.subr.mxu0 0.0
    %749 = vmatpush1.msra.mxu0 0.0
    %750 = vmatprep.subr.mxu0 0.0
    %751 = vmatpush1.msra.mxu0 0.0
    %752 = vmatprep.subr.mxu0 0.0
    %753 = vmatpush1.msra.mxu0 0.0
    %754 = vmatprep.subr.mxu0 0.0
    %755 = vmatpush1.msra.mxu0 0.0
    %756 = vmatprep.subr.mxu0 0.0
    %757 = vmatpush1.msra.mxu0 0.0
    %758 = vmatprep.subr.mxu0 0.0
    %759 = vmatpush1.msra.mxu0 0.0
    %760 = vmatprep.subr.mxu0 0.0
    %761 = vmatpush1.msra.mxu0 0.0
    %762 = vmatprep.subr.mxu0 0.0
    %763 = vmatpush1.msra.mxu0 0.0
    %764 = vmatprep.subr.mxu0 0.0
    %765 = vmatpush1.msra.mxu0 0.0
    %766 = vmatprep.subr.mxu0 0.0
    %767 = vmatpush1.msra.mxu0 0.0
    %768 = vmatprep.subr.mxu0 0.0
    %769 = vmatpush1.msra.mxu0 0.0
    %770 = vmatprep.subr.mxu0 0.0
    %771 = vmatpush1.msra.mxu0 0.0
    %772 = vmatprep.subr.mxu0 0.0
    %773 = vmatpush1.msra.mxu0 0.0
    %774 = vmatprep.subr.mxu0 0.0
    %775 = vmatpush1.msra.mxu0 0.0
    %776 = vmatprep.subr.mxu0 0.0
    %777 = vmatpush1.msra.mxu0 0.0
    %778 = vmatprep.subr.mxu0 0.0
    %779 = vmatpush1.msra.mxu0 0.0
    %780 = vmatprep.subr.mxu0 0.0
    %781 = vmatpush1.msra.mxu0 0.0
    %782 = vmatprep.subr.mxu0 0.0
    %783 = vmatpush1.msra.mxu0 0.0
    %784 = vmatprep.mubr.f32.mxu0 0.0
    %785 = vmatmul.mubr.f32.gmra.mrb[0].mxu0 %v718
    %v786 = vpop.f32.mrb[0].mxu0
    %v787 = vadd.f32 0.0, %v786
    %v788 = vpop.f32.mrb[0].mxu0
    %789 = vdwg.mxu0
    %v790 = vadd.f32 %v177, %v787
    %v791 = vmax.f32 %v790, 0.0
    %792 = vst.msk [vmem:[#allocation2 + $0x38] sm:$0xff] %vm184, %v791
    %v793 = vld [vmem:[#allocation2] sm:$0xff]
    %v794 = vld [vmem:[#allocation2 + $0x8] sm:$0xff]
    %v795 = vld [vmem:[#allocation2 + $0x10] sm:$0xff]
    %v796 = vld [vmem:[#allocation2 + $0x18] sm:$0xff]
    %v797 = vld [vmem:[#allocation2 + $0x20] sm:$0xff]
    %v798 = vld [vmem:[#allocation2 + $0x28] sm:$0xff]
    %v799 = vld [vmem:[#allocation2 + $0x30] sm:$0xff]
    %v800 = vld [vmem:[#allocation2 + $0x38] sm:$0xff]
    %v801 = vld [vmem:[%s4] sm:$0xff]
    %v802 = vld [vmem:[%s4 + $0x8] sm:$0xff]
    %v803 = vld [vmem:[%s4 + $0x10] sm:$0xff]
    %v804 = vld [vmem:[%s4 + $0x18] sm:$0xff]
    %v805 = vld [vmem:[%s6] sm:$0x1]
    %v807 = vlaneseq
    %v808 = vshrl.u32 %v807, 7
    %v809 = vsub.s32 0, %v808
    %v810 = vrot.slane %v805, %v809
    %v813 = vsel %vm184, %v793, 0
    %v816 = vsel %vm184, %v794, 0
    %v819 = vsel %vm184, %v795, 0
    %v822 = vsel %vm184, %v796, 0
    %v825 = vsel %vm184, %v797, 0
    %v828 = vsel %vm184, %v798, 0
    %v831 = vsel %vm184, %v799, 0
    %v834 = vsel %vm184, %v800, 0
    %836 = vmatprep.subr.mxu0 0.0
    %837 = vmatpush1.msra.mxu0 %v801
    %838 = vmatprep.subr.mxu0 0.0
    %839 = vmatpush1.msra.mxu0 %v802
    %840 = vmatprep.subr.mxu0 0.0
    %841 = vmatpush1.msra.mxu0 %v803
    %842 = vmatprep.subr.mxu0 0.0
    %843 = vmatpush1.msra.mxu0 %v804
    %844 = vmatprep.subr.mxu0 0.0
    %845 = vmatpush1.msra.mxu0 0.0
    %846 = vmatprep.subr.mxu0 0.0
    %847 = vmatpush1.msra.mxu0 0.0
    %848 = vmatprep.subr.mxu0 0.0
    %849 = vmatpush1.msra.mxu0 0.0
    %850 = vmatprep.subr.mxu0 0.0
    %851 = vmatpush1.msra.mxu0 0.0
    %852 = vmatprep.subr.mxu0 0.0
    %853 = vmatpush1.msra.mxu0 0.0
    %854 = vmatprep.subr.mxu0 0.0
    %855 = vmatpush1.msra.mxu0 0.0
    %856 = vmatprep.subr.mxu0 0.0
    %857 = vmatpush1.msra.mxu0 0.0
    %858 = vmatprep.subr.mxu0 0.0
    %859 = vmatpush1.msra.mxu0 0.0
    %860 = vmatprep.subr.mxu0 0.0
    %861 = vmatpush1.msra.mxu0 0.0
    %862 = vmatprep.subr.mxu0 0.0
    %863 = vmatpush1.msra.mxu0 0.0
    %864 = vmatprep.subr.mxu0 0.0
    %865 = vmatpush1.msra.mxu0 0.0
    %866 = vmatprep.subr.mxu0 0.0
    %867 = vmatpush1.msra.mxu0 0.0
    %868 = vmatprep.subr.mxu0 0.0
    %869 = vmatpush1.msra.mxu0 0.0
    %870 = vmatprep.subr.mxu0 0.0
    %871 = vmatpush1.msra.mxu0 0.0
    %872 = vmatprep.subr.mxu0 0.0
    %873 = vmatpush1.msra.mxu0 0.0
    %874 = vmatprep.subr.mxu0 0.0
    %875 = vmatpush1.msra.mxu0 0.0
    %876 = vmatprep.subr.mxu0 0.0
    %877 = vmatpush1.msra.mxu0 0.0
    %878 = vmatprep.subr.mxu0 0.0
    %879 = vmatpush1.msra.mxu0 0.0
    %880 = vmatprep.subr.mxu0 0.0
    %881 = vmatpush1.msra.mxu0 0.0
    %882 = vmatprep.subr.mxu0 0.0
    %883 = vmatpush1.msra.mxu0 0.0
    %884 = vmatprep.subr.mxu0 0.0
    %885 = vmatpush1.msra.mxu0 0.0
    %886 = vmatprep.subr.mxu0 0.0
    %887 = vmatpush1.msra.mxu0 0.0
    %888 = vmatprep.subr.mxu0 0.0
    %889 = vmatpush1.msra.mxu0 0.0
    %890 = vmatprep.subr.mxu0 0.0
    %891 = vmatpush1.msra.mxu0 0.0
    %892 = vmatprep.subr.mxu0 0.0
    %893 = vmatpush1.msra.mxu0 0.0
    %894 = vmatprep.subr.mxu0 0.0
    %895 = vmatpush1.msra.mxu0 0.0
    %896 = vmatprep.subr.mxu0 0.0
    %897 = vmatpush1.msra.mxu0 0.0
    %898 = vmatprep.subr.mxu0 0.0
    %899 = vmatpush1.msra.mxu0 0.0
    %900 = vmatprep.mubr.f32.mxu0 0.0
    %901 = vmatmul.mubr.f32.gmra.mrb[0].mxu0 %v813
    %v902 = vpop.f32.mrb[0].mxu0
    %v903 = vadd.f32 %v810, %v902
    %v904 = vpop.f32.mrb[0].mxu0
    %905 = vmatprep.mubr.f32.mxu0 0.0
    %906 = vmatmul.mubr.f32.gmra.mrb[0].mxu0 %v816
    %v907 = vpop.f32.mrb[0].mxu0
    %v908 = vadd.f32 %v810, %v907
    %v909 = vpop.f32.mrb[0].mxu0
    %910 = vmatprep.mubr.f32.mxu0 0.0
    %911 = vmatmul.mubr.f32.gmra.mrb[0].mxu0 %v819
    %v912 = vpop.f32.mrb[0].mxu0
    %v913 = vadd.f32 %v810, %v912
    %v914 = vpop.f32.mrb[0].mxu0
    %915 = vmatprep.mubr.f32.mxu0 0.0
    %916 = vmatmul.mubr.f32.gmra.mrb[0].mxu0 %v822
    %v917 = vpop.f32.mrb[0].mxu0
    %v918 = vadd.f32 %v810, %v917
    %v919 = vpop.f32.mrb[0].mxu0
    %920 = vmatprep.mubr.f32.mxu0 0.0
    %921 = vmatmul.mubr.f32.gmra.mrb[0].mxu0 %v825
    %v922 = vpop.f32.mrb[0].mxu0
    %v923 = vadd.f32 %v810, %v922
    %v924 = vpop.f32.mrb[0].mxu0
    %925 = vmatprep.mubr.f32.mxu0 0.0
    %926 = vmatmul.mubr.f32.gmra.mrb[0].mxu0 %v828
    %v927 = vpop.f32.mrb[0].mxu0
    %v928 = vadd.f32 %v810, %v927
    %v929 = vpop.f32.mrb[0].mxu0
    %930 = vmatprep.mubr.f32.mxu0 0.0
    %931 = vmatmul.mubr.f32.gmra.mrb[0].mxu0 %v831
    %v932 = vpop.f32.mrb[0].mxu0
    %v933 = vadd.f32 %v810, %v932
    %v934 = vpop.f32.mrb[0].mxu0
    %935 = vmatprep.mubr.f32.mxu0 0.0
    %936 = vmatmul.mubr.f32.gmra.mrb[0].mxu0 %v834
    %v937 = vpop.f32.mrb[0].mxu0
    %v938 = vadd.f32 %v810, %v937
    %v939 = vpop.f32.mrb[0].mxu0
    %940 = vdwg.mxu0
    %v941 = vld [vmem:[%s5] sm:$0xff]
    %v942 = vld [vmem:[%s5 + $0x8] sm:$0xff]
    %v943 = vld [vmem:[%s5 + $0x10] sm:$0xff]
    %v944 = vld [vmem:[%s5 + $0x18] sm:$0xff]
    %945 = vmatprep.subr.mxu0 0.0
    %946 = vmatpush1.msra.mxu0 %v941
    %947 = vmatprep.subr.mxu0 0.0
    %948 = vmatpush1.msra.mxu0 %v942
    %949 = vmatprep.subr.mxu0 0.0
    %950 = vmatpush1.msra.mxu0 %v943
    %951 = vmatprep.subr.mxu0 0.0
    %952 = vmatpush1.msra.mxu0 %v944
    %953 = vmatprep.subr.mxu0 0.0
    %954 = vmatpush1.msra.mxu0 0.0
    %955 = vmatprep.subr.mxu0 0.0
    %956 = vmatpush1.msra.mxu0 0.0
    %957 = vmatprep.subr.mxu0 0.0
    %958 = vmatpush1.msra.mxu0 0.0
    %959 = vmatprep.subr.mxu0 0.0
    %960 = vmatpush1.msra.mxu0 0.0
    %961 = vmatprep.subr.mxu0 0.0
    %962 = vmatpush1.msra.mxu0 0.0
    %963 = vmatprep.subr.mxu0 0.0
    %964 = vmatpush1.msra.mxu0 0.0
    %965 = vmatprep.subr.mxu0 0.0
    %966 = vmatpush1.msra.mxu0 0.0
    %967 = vmatprep.subr.mxu0 0.0
    %968 = vmatpush1.msra.mxu0 0.0
    %969 = vmatprep.subr.mxu0 0.0
    %970 = vmatpush1.msra.mxu0 0.0
    %971 = vmatprep.subr.mxu0 0.0
    %972 = vmatpush1.msra.mxu0 0.0
    %973 = vmatprep.subr.mxu0 0.0
    %974 = vmatpush1.msra.mxu0 0.0
    %975 = vmatprep.subr.mxu0 0.0
    %976 = vmatpush1.msra.mxu0 0.0
    %977 = vmatprep.subr.mxu0 0.0
    %978 = vmatpush1.msra.mxu0 0.0
    %979 = vmatprep.subr.mxu0 0.0
    %980 = vmatpush1.msra.mxu0 0.0
    %981 = vmatprep.subr.mxu0 0.0
    %982 = vmatpush1.msra.mxu0 0.0
    %983 = vmatprep.subr.mxu0 0.0
    %984 = vmatpush1.msra.mxu0 0.0
    %985 = vmatprep.subr.mxu0 0.0
    %986 = vmatpush1.msra.mxu0 0.0
    %987 = vmatprep.subr.mxu0 0.0
    %988 = vmatpush1.msra.mxu0 0.0
    %989 = vmatprep.subr.mxu0 0.0
    %990 = vmatpush1.msra.mxu0 0.0
    %991 = vmatprep.subr.mxu0 0.0
    %992 = vmatpush1.msra.mxu0 0.0
    %993 = vmatprep.subr.mxu0 0.0
    %994 = vmatpush1.msra.mxu0 0.0
    %995 = vmatprep.subr.mxu0 0.0
    %996 = vmatpush1.msra.mxu0 0.0
    %997 = vmatprep.subr.mxu0 0.0
    %998 = vmatpush1.msra.mxu0 0.0
    %999 = vmatprep.subr.mxu0 0.0
    %1000 = vmatpush1.msra.mxu0 0.0
    %1001 = vmatprep.subr.mxu0 0.0
    %1002 = vmatpush1.msra.mxu0 0.0
    %1003 = vmatprep.subr.mxu0 0.0
    %1004 = vmatpush1.msra.mxu0 0.0
    %1005 = vmatprep.subr.mxu0 0.0
    %1006 = vmatpush1.msra.mxu0 0.0
    %1007 = vmatprep.subr.mxu0 0.0
    %1008 = vmatpush1.msra.mxu0 0.0
    %1009 = vmatprep.mubr.f32.mxu0 0.0
    %1010 = vmatmul.mubr.f32.gmra.mrb[0].mxu0 %v186
    %v1011 = vpop.f32.mrb[0].mxu0
    %v1012 = vadd.f32 0.0, %v1011
    %v1013 = vpop.f32.mrb[0].mxu0
    %1014 = vdwg.mxu0
    %v1015 = vadd.f32 %v903, %v1012
    %v1016 = vmax.f32 %v1015, 0.0
    %v1018 = vsel %vm184, %v1016, 0
    %1020 = vmatprep.subr.mxu0 0.0
    %1021 = vmatpush1.msra.mxu0 %v941
    %1022 = vmatprep.subr.mxu0 0.0
    %1023 = vmatpush1.msra.mxu0 %v942
    %1024 = vmatprep.subr.mxu0 0.0
    %1025 = vmatpush1.msra.mxu0 %v943
    %1026 = vmatprep.subr.mxu0 0.0
    %1027 = vmatpush1.msra.mxu0 %v944
    %1028 = vmatprep.subr.mxu0 0.0
    %1029 = vmatpush1.msra.mxu0 0.0
    %1030 = vmatprep.subr.mxu0 0.0
    %1031 = vmatpush1.msra.mxu0 0.0
    %1032 = vmatprep.subr.mxu0 0.0
    %1033 = vmatpush1.msra.mxu0 0.0
    %1034 = vmatprep.subr.mxu0 0.0
    %1035 = vmatpush1.msra.mxu0 0.0
    %1036 = vmatprep.subr.mxu0 0.0
    %1037 = vmatpush1.msra.mxu0 0.0
    %1038 = vmatprep.subr.mxu0 0.0
    %1039 = vmatpush1.msra.mxu0 0.0
    %1040 = vmatprep.subr.mxu0 0.0
    %1041 = vmatpush1.msra.mxu0 0.0
    %1042 = vmatprep.subr.mxu0 0.0
    %1043 = vmatpush1.msra.mxu0 0.0
    %1044 = vmatprep.subr.mxu0 0.0
    %1045 = vmatpush1.msra.mxu0 0.0
    %1046 = vmatprep.subr.mxu0 0.0
    %1047 = vmatpush1.msra.mxu0 0.0
    %1048 = vmatprep.subr.mxu0 0.0
    %1049 = vmatpush1.msra.mxu0 0.0
    %1050 = vmatprep.subr.mxu0 0.0
    %1051 = vmatpush1.msra.mxu0 0.0
    %1052 = vmatprep.subr.mxu0 0.0
    %1053 = vmatpush1.msra.mxu0 0.0
    %1054 = vmatprep.subr.mxu0 0.0
    %1055 = vmatpush1.msra.mxu0 0.0
    %1056 = vmatprep.subr.mxu0 0.0
    %1057 = vmatpush1.msra.mxu0 0.0
    %1058 = vmatprep.subr.mxu0 0.0
    %1059 = vmatpush1.msra.mxu0 0.0
    %1060 = vmatprep.subr.mxu0 0.0
    %1061 = vmatpush1.msra.mxu0 0.0
    %1062 = vmatprep.subr.mxu0 0.0
    %1063 = vmatpush1.msra.mxu0 0.0
    %1064 = vmatprep.subr.mxu0 0.0
    %1065 = vmatpush1.msra.mxu0 0.0
    %1066 = vmatprep.subr.mxu0 0.0
    %1067 = vmatpush1.msra.mxu0 0.0
    %1068 = vmatprep.subr.mxu0 0.0
    %1069 = vmatpush1.msra.mxu0 0.0
    %1070 = vmatprep.subr.mxu0 0.0
    %1071 = vmatpush1.msra.mxu0 0.0
    %1072 = vmatprep.subr.mxu0 0.0
    %1073 = vmatpush1.msra.mxu0 0.0
    %1074 = vmatprep.subr.mxu0 0.0
    %1075 = vmatpush1.msra.mxu0 0.0
    %1076 = vmatprep.subr.mxu0 0.0
    %1077 = vmatpush1.msra.mxu0 0.0
    %1078 = vmatprep.subr.mxu0 0.0
    %1079 = vmatpush1.msra.mxu0 0.0
    %1080 = vmatprep.subr.mxu0 0.0
    %1081 = vmatpush1.msra.mxu0 0.0
    %1082 = vmatprep.subr.mxu0 0.0
    %1083 = vmatpush1.msra.mxu0 0.0
    %1084 = vmatprep.mubr.f32.mxu0 0.0
    %1085 = vmatmul.mubr.f32.gmra.mrb[0].mxu0 %v1018
    %v1086 = vpop.f32.mrb[0].mxu0
    %v1087 = vadd.f32 0.0, %v1086
    %v1088 = vpop.f32.mrb[0].mxu0
    %1089 = vdwg.mxu0
    %v1090 = vadd.f32 %v908, %v1087
    %v1091 = vmax.f32 %v1090, 0.0
    %v1093 = vsel %vm184, %v1091, 0
    %1095 = vmatprep.subr.mxu0 0.0
    %1096 = vmatpush1.msra.mxu0 %v941
    %1097 = vmatprep.subr.mxu0 0.0
    %1098 = vmatpush1.msra.mxu0 %v942
    %1099 = vmatprep.subr.mxu0 0.0
    %1100 = vmatpush1.msra.mxu0 %v943
    %1101 = vmatprep.subr.mxu0 0.0
    %1102 = vmatpush1.msra.mxu0 %v944
    %1103 = vmatprep.subr.mxu0 0.0
    %1104 = vmatpush1.msra.mxu0 0.0
    %1105 = vmatprep.subr.mxu0 0.0
    %1106 = vmatpush1.msra.mxu0 0.0
    %1107 = vmatprep.subr.mxu0 0.0
    %1108 = vmatpush1.msra.mxu0 0.0
    %1109 = vmatprep.subr.mxu0 0.0
    %1110 = vmatpush1.msra.mxu0 0.0
    %1111 = vmatprep.subr.mxu0 0.0
    %1112 = vmatpush1.msra.mxu0 0.0
    %1113 = vmatprep.subr.mxu0 0.0
    %1114 = vmatpush1.msra.mxu0 0.0
    %1115 = vmatprep.subr.mxu0 0.0
    %1116 = vmatpush1.msra.mxu0 0.0
    %1117 = vmatprep.subr.mxu0 0.0
    %1118 = vmatpush1.msra.mxu0 0.0
    %1119 = vmatprep.subr.mxu0 0.0
    %1120 = vmatpush1.msra.mxu0 0.0
    %1121 = vmatprep.subr.mxu0 0.0
    %1122 = vmatpush1.msra.mxu0 0.0
    %1123 = vmatprep.subr.mxu0 0.0
    %1124 = vmatpush1.msra.mxu0 0.0
    %1125 = vmatprep.subr.mxu0 0.0
    %1126 = vmatpush1.msra.mxu0 0.0
    %1127 = vmatprep.subr.mxu0 0.0
    %1128 = vmatpush1.msra.mxu0 0.0
    %1129 = vmatprep.subr.mxu0 0.0
    %1130 = vmatpush1.msra.mxu0 0.0
    %1131 = vmatprep.subr.mxu0 0.0
    %1132 = vmatpush1.msra.mxu0 0.0
    %1133 = vmatprep.subr.mxu0 0.0
    %1134 = vmatpush1.msra.mxu0 0.0
    %1135 = vmatprep.subr.mxu0 0.0
    %1136 = vmatpush1.msra.mxu0 0.0
    %1137 = vmatprep.subr.mxu0 0.0
    %1138 = vmatpush1.msra.mxu0 0.0
    %1139 = vmatprep.subr.mxu0 0.0
    %1140 = vmatpush1.msra.mxu0 0.0
    %1141 = vmatprep.subr.mxu0 0.0
    %1142 = vmatpush1.msra.mxu0 0.0
    %1143 = vmatprep.subr.mxu0 0.0
    %1144 = vmatpush1.msra.mxu0 0.0
    %1145 = vmatprep.subr.mxu0 0.0
    %1146 = vmatpush1.msra.mxu0 0.0
    %1147 = vmatprep.subr.mxu0 0.0
    %1148 = vmatpush1.msra.mxu0 0.0
    %1149 = vmatprep.subr.mxu0 0.0
    %1150 = vmatpush1.msra.mxu0 0.0
    %1151 = vmatprep.subr.mxu0 0.0
    %1152 = vmatpush1.msra.mxu0 0.0
    %1153 = vmatprep.subr.mxu0 0.0
    %1154 = vmatpush1.msra.mxu0 0.0
    %1155 = vmatprep.subr.mxu0 0.0
    %1156 = vmatpush1.msra.mxu0 0.0
    %1157 = vmatprep.subr.mxu0 0.0
    %1158 = vmatpush1.msra.mxu0 0.0
    %1159 = vmatprep.mubr.f32.mxu0 0.0
    %1160 = vmatmul.mubr.f32.gmra.mrb[0].mxu0 %v1093
    %v1161 = vpop.f32.mrb[0].mxu0
    %v1162 = vadd.f32 0.0, %v1161
    %v1163 = vpop.f32.mrb[0].mxu0
    %1164 = vdwg.mxu0
    %v1165 = vadd.f32 %v913, %v1162
    %v1166 = vmax.f32 %v1165, 0.0
    %v1168 = vsel %vm184, %v1166, 0
    %1170 = vmatprep.subr.mxu0 0.0
    %1171 = vmatpush1.msra.mxu0 %v941
    %1172 = vmatprep.subr.mxu0 0.0
    %1173 = vmatpush1.msra.mxu0 %v942
    %1174 = vmatprep.subr.mxu0 0.0
    %1175 = vmatpush1.msra.mxu0 %v943
    %1176 = vmatprep.subr.mxu0 0.0
    %1177 = vmatpush1.msra.mxu0 %v944
    %1178 = vmatprep.subr.mxu0 0.0
    %1179 = vmatpush1.msra.mxu0 0.0
    %1180 = vmatprep.subr.mxu0 0.0
    %1181 = vmatpush1.msra.mxu0 0.0
    %1182 = vmatprep.subr.mxu0 0.0
    %1183 = vmatpush1.msra.mxu0 0.0
    %1184 = vmatprep.subr.mxu0 0.0
    %1185 = vmatpush1.msra.mxu0 0.0
    %1186 = vmatprep.subr.mxu0 0.0
    %1187 = vmatpush1.msra.mxu0 0.0
    %1188 = vmatprep.subr.mxu0 0.0
    %1189 = vmatpush1.msra.mxu0 0.0
    %1190 = vmatprep.subr.mxu0 0.0
    %1191 = vmatpush1.msra.mxu0 0.0
    %1192 = vmatprep.subr.mxu0 0.0
    %1193 = vmatpush1.msra.mxu0 0.0
    %1194 = vmatprep.subr.mxu0 0.0
    %1195 = vmatpush1.msra.mxu0 0.0
    %1196 = vmatprep.subr.mxu0 0.0
    %1197 = vmatpush1.msra.mxu0 0.0
    %1198 = vmatprep.subr.mxu0 0.0
    %1199 = vmatpush1.msra.mxu0 0.0
    %1200 = vmatprep.subr.mxu0 0.0
    %1201 = vmatpush1.msra.mxu0 0.0
    %1202 = vmatprep.subr.mxu0 0.0
    %1203 = vmatpush1.msra.mxu0 0.0
    %1204 = vmatprep.subr.mxu0 0.0
    %1205 = vmatpush1.msra.mxu0 0.0
    %1206 = vmatprep.subr.mxu0 0.0
    %1207 = vmatpush1.msra.mxu0 0.0
    %1208 = vmatprep.subr.mxu0 0.0
    %1209 = vmatpush1.msra.mxu0 0.0
    %1210 = vmatprep.subr.mxu0 0.0
    %1211 = vmatpush1.msra.mxu0 0.0
    %1212 = vmatprep.subr.mxu0 0.0
    %1213 = vmatpush1.msra.mxu0 0.0
    %1214 = vmatprep.subr.mxu0 0.0
    %1215 = vmatpush1.msra.mxu0 0.0
    %1216 = vmatprep.subr.mxu0 0.0
    %1217 = vmatpush1.msra.mxu0 0.0
    %1218 = vmatprep.subr.mxu0 0.0
    %1219 = vmatpush1.msra.mxu0 0.0
    %1220 = vmatprep.subr.mxu0 0.0
    %1221 = vmatpush1.msra.mxu0 0.0
    %1222 = vmatprep.subr.mxu0 0.0
    %1223 = vmatpush1.msra.mxu0 0.0
    %1224 = vmatprep.subr.mxu0 0.0
    %1225 = vmatpush1.msra.mxu0 0.0
    %1226 = vmatprep.subr.mxu0 0.0
    %1227 = vmatpush1.msra.mxu0 0.0
    %1228 = vmatprep.subr.mxu0 0.0
    %1229 = vmatpush1.msra.mxu0 0.0
    %1230 = vmatprep.subr.mxu0 0.0
    %1231 = vmatpush1.msra.mxu0 0.0
    %1232 = vmatprep.subr.mxu0 0.0
    %1233 = vmatpush1.msra.mxu0 0.0
    %1234 = vmatprep.mubr.f32.mxu0 0.0
    %1235 = vmatmul.mubr.f32.gmra.mrb[0].mxu0 %v1168
    %v1236 = vpop.f32.mrb[0].mxu0
    %v1237 = vadd.f32 0.0, %v1236
    %v1238 = vpop.f32.mrb[0].mxu0
    %1239 = vdwg.mxu0
    %v1240 = vadd.f32 %v918, %v1237
    %v1241 = vmax.f32 %v1240, 0.0
    %v1243 = vsel %vm184, %v1241, 0
    %1245 = vmatprep.subr.mxu0 0.0
    %1246 = vmatpush1.msra.mxu0 %v941
    %1247 = vmatprep.subr.mxu0 0.0
    %1248 = vmatpush1.msra.mxu0 %v942
    %1249 = vmatprep.subr.mxu0 0.0
    %1250 = vmatpush1.msra.mxu0 %v943
    %1251 = vmatprep.subr.mxu0 0.0
    %1252 = vmatpush1.msra.mxu0 %v944
    %1253 = vmatprep.subr.mxu0 0.0
    %1254 = vmatpush1.msra.mxu0 0.0
    %1255 = vmatprep.subr.mxu0 0.0
    %1256 = vmatpush1.msra.mxu0 0.0
    %1257 = vmatprep.subr.mxu0 0.0
    %1258 = vmatpush1.msra.mxu0 0.0
    %1259 = vmatprep.subr.mxu0 0.0
    %1260 = vmatpush1.msra.mxu0 0.0
    %1261 = vmatprep.subr.mxu0 0.0
    %1262 = vmatpush1.msra.mxu0 0.0
    %1263 = vmatprep.subr.mxu0 0.0
    %1264 = vmatpush1.msra.mxu0 0.0
    %1265 = vmatprep.subr.mxu0 0.0
    %1266 = vmatpush1.msra.mxu0 0.0
    %1267 = vmatprep.subr.mxu0 0.0
    %1268 = vmatpush1.msra.mxu0 0.0
    %1269 = vmatprep.subr.mxu0 0.0
    %1270 = vmatpush1.msra.mxu0 0.0
    %1271 = vmatprep.subr.mxu0 0.0
    %1272 = vmatpush1.msra.mxu0 0.0
    %1273 = vmatprep.subr.mxu0 0.0
    %1274 = vmatpush1.msra.mxu0 0.0
    %1275 = vmatprep.subr.mxu0 0.0
    %1276 = vmatpush1.msra.mxu0 0.0
    %1277 = vmatprep.subr.mxu0 0.0
    %1278 = vmatpush1.msra.mxu0 0.0
    %1279 = vmatprep.subr.mxu0 0.0
    %1280 = vmatpush1.msra.mxu0 0.0
    %1281 = vmatprep.subr.mxu0 0.0
    %1282 = vmatpush1.msra.mxu0 0.0
    %1283 = vmatprep.subr.mxu0 0.0
    %1284 = vmatpush1.msra.mxu0 0.0
    %1285 = vmatprep.subr.mxu0 0.0
    %1286 = vmatpush1.msra.mxu0 0.0
    %1287 = vmatprep.subr.mxu0 0.0
    %1288 = vmatpush1.msra.mxu0 0.0
    %1289 = vmatprep.subr.mxu0 0.0
    %1290 = vmatpush1.msra.mxu0 0.0
    %1291 = vmatprep.subr.mxu0 0.0
    %1292 = vmatpush1.msra.mxu0 0.0
    %1293 = vmatprep.subr.mxu0 0.0
    %1294 = vmatpush1.msra.mxu0 0.0
    %1295 = vmatprep.subr.mxu0 0.0
    %1296 = vmatpush1.msra.mxu0 0.0
    %1297 = vmatprep.subr.mxu0 0.0
    %1298 = vmatpush1.msra.mxu0 0.0
    %1299 = vmatprep.subr.mxu0 0.0
    %1300 = vmatpush1.msra.mxu0 0.0
    %1301 = vmatprep.subr.mxu0 0.0
    %1302 = vmatpush1.msra.mxu0 0.0
    %1303 = vmatprep.subr.mxu0 0.0
    %1304 = vmatpush1.msra.mxu0 0.0
    %1305 = vmatprep.subr.mxu0 0.0
    %1306 = vmatpush1.msra.mxu0 0.0
    %1307 = vmatprep.subr.mxu0 0.0
    %1308 = vmatpush1.msra.mxu0 0.0
    %1309 = vmatprep.mubr.f32.mxu0 0.0
    %1310 = vmatmul.mubr.f32.gmra.mrb[0].mxu0 %v1243
    %v1311 = vpop.f32.mrb[0].mxu0
    %v1312 = vadd.f32 0.0, %v1311
    %v1313 = vpop.f32.mrb[0].mxu0
    %1314 = vdwg.mxu0
    %v1315 = vadd.f32 %v923, %v1312
    %v1316 = vmax.f32 %v1315, 0.0
    %v1318 = vsel %vm184, %v1316, 0
    %1320 = vmatprep.subr.mxu0 0.0
    %1321 = vmatpush1.msra.mxu0 %v941
    %1322 = vmatprep.subr.mxu0 0.0
    %1323 = vmatpush1.msra.mxu0 %v942
    %1324 = vmatprep.subr.mxu0 0.0
    %1325 = vmatpush1.msra.mxu0 %v943
    %1326 = vmatprep.subr.mxu0 0.0
    %1327 = vmatpush1.msra.mxu0 %v944
    %1328 = vmatprep.subr.mxu0 0.0
    %1329 = vmatpush1.msra.mxu0 0.0
    %1330 = vmatprep.subr.mxu0 0.0
    %1331 = vmatpush1.msra.mxu0 0.0
    %1332 = vmatprep.subr.mxu0 0.0
    %1333 = vmatpush1.msra.mxu0 0.0
    %1334 = vmatprep.subr.mxu0 0.0
    %1335 = vmatpush1.msra.mxu0 0.0
    %1336 = vmatprep.subr.mxu0 0.0
    %1337 = vmatpush1.msra.mxu0 0.0
    %1338 = vmatprep.subr.mxu0 0.0
    %1339 = vmatpush1.msra.mxu0 0.0
    %1340 = vmatprep.subr.mxu0 0.0
    %1341 = vmatpush1.msra.mxu0 0.0
    %1342 = vmatprep.subr.mxu0 0.0
    %1343 = vmatpush1.msra.mxu0 0.0
    %1344 = vmatprep.subr.mxu0 0.0
    %1345 = vmatpush1.msra.mxu0 0.0
    %1346 = vmatprep.subr.mxu0 0.0
    %1347 = vmatpush1.msra.mxu0 0.0
    %1348 = vmatprep.subr.mxu0 0.0
    %1349 = vmatpush1.msra.mxu0 0.0
    %1350 = vmatprep.subr.mxu0 0.0
    %1351 = vmatpush1.msra.mxu0 0.0
    %1352 = vmatprep.subr.mxu0 0.0
    %1353 = vmatpush1.msra.mxu0 0.0
    %1354 = vmatprep.subr.mxu0 0.0
    %1355 = vmatpush1.msra.mxu0 0.0
    %1356 = vmatprep.subr.mxu0 0.0
    %1357 = vmatpush1.msra.mxu0 0.0
    %1358 = vmatprep.subr.mxu0 0.0
    %1359 = vmatpush1.msra.mxu0 0.0
    %1360 = vmatprep.subr.mxu0 0.0
    %1361 = vmatpush1.msra.mxu0 0.0
    %1362 = vmatprep.subr.mxu0 0.0
    %1363 = vmatpush1.msra.mxu0 0.0
    %1364 = vmatprep.subr.mxu0 0.0
    %1365 = vmatpush1.msra.mxu0 0.0
    %1366 = vmatprep.subr.mxu0 0.0
    %1367 = vmatpush1.msra.mxu0 0.0
    %1368 = vmatprep.subr.mxu0 0.0
    %1369 = vmatpush1.msra.mxu0 0.0
    %1370 = vmatprep.subr.mxu0 0.0
    %1371 = vmatpush1.msra.mxu0 0.0
    %1372 = vmatprep.subr.mxu0 0.0
    %1373 = vmatpush1.msra.mxu0 0.0
    %1374 = vmatprep.subr.mxu0 0.0
    %1375 = vmatpush1.msra.mxu0 0.0
    %1376 = vmatprep.subr.mxu0 0.0
    %1377 = vmatpush1.msra.mxu0 0.0
    %1378 = vmatprep.subr.mxu0 0.0
    %1379 = vmatpush1.msra.mxu0 0.0
    %1380 = vmatprep.subr.mxu0 0.0
    %1381 = vmatpush1.msra.mxu0 0.0
    %1382 = vmatprep.subr.mxu0 0.0
    %1383 = vmatpush1.msra.mxu0 0.0
    %1384 = vmatprep.mubr.f32.mxu0 0.0
    %1385 = vmatmul.mubr.f32.gmra.mrb[0].mxu0 %v1318
    %v1386 = vpop.f32.mrb[0].mxu0
    %v1387 = vadd.f32 0.0, %v1386
    %v1388 = vpop.f32.mrb[0].mxu0
    %1389 = vdwg.mxu0
    %v1390 = vadd.f32 %v928, %v1387
    %v1391 = vmax.f32 %v1390, 0.0
    %v1393 = vsel %vm184, %v1391, 0
    %1395 = vmatprep.subr.mxu0 0.0
    %1396 = vmatpush1.msra.mxu0 %v941
    %1397 = vmatprep.subr.mxu0 0.0
    %1398 = vmatpush1.msra.mxu0 %v942
    %1399 = vmatprep.subr.mxu0 0.0
    %1400 = vmatpush1.msra.mxu0 %v943
    %1401 = vmatprep.subr.mxu0 0.0
    %1402 = vmatpush1.msra.mxu0 %v944
    %1403 = vmatprep.subr.mxu0 0.0
    %1404 = vmatpush1.msra.mxu0 0.0
    %1405 = vmatprep.subr.mxu0 0.0
    %1406 = vmatpush1.msra.mxu0 0.0
    %1407 = vmatprep.subr.mxu0 0.0
    %1408 = vmatpush1.msra.mxu0 0.0
    %1409 = vmatprep.subr.mxu0 0.0
    %1410 = vmatpush1.msra.mxu0 0.0
    %1411 = vmatprep.subr.mxu0 0.0
    %1412 = vmatpush1.msra.mxu0 0.0
    %1413 = vmatprep.subr.mxu0 0.0
    %1414 = vmatpush1.msra.mxu0 0.0
    %1415 = vmatprep.subr.mxu0 0.0
    %1416 = vmatpush1.msra.mxu0 0.0
    %1417 = vmatprep.subr.mxu0 0.0
    %1418 = vmatpush1.msra.mxu0 0.0
    %1419 = vmatprep.subr.mxu0 0.0
    %1420 = vmatpush1.msra.mxu0 0.0
    %1421 = vmatprep.subr.mxu0 0.0
    %1422 = vmatpush1.msra.mxu0 0.0
    %1423 = vmatprep.subr.mxu0 0.0
    %1424 = vmatpush1.msra.mxu0 0.0
    %1425 = vmatprep.subr.mxu0 0.0
    %1426 = vmatpush1.msra.mxu0 0.0
    %1427 = vmatprep.subr.mxu0 0.0
    %1428 = vmatpush1.msra.mxu0 0.0
    %1429 = vmatprep.subr.mxu0 0.0
    %1430 = vmatpush1.msra.mxu0 0.0
    %1431 = vmatprep.subr.mxu0 0.0
    %1432 = vmatpush1.msra.mxu0 0.0
    %1433 = vmatprep.subr.mxu0 0.0
    %1434 = vmatpush1.msra.mxu0 0.0
    %1435 = vmatprep.subr.mxu0 0.0
    %1436 = vmatpush1.msra.mxu0 0.0
    %1437 = vmatprep.subr.mxu0 0.0
    %1438 = vmatpush1.msra.mxu0 0.0
    %1439 = vmatprep.subr.mxu0 0.0
    %1440 = vmatpush1.msra.mxu0 0.0
    %1441 = vmatprep.subr.mxu0 0.0
    %1442 = vmatpush1.msra.mxu0 0.0
    %1443 = vmatprep.subr.mxu0 0.0
    %1444 = vmatpush1.msra.mxu0 0.0
    %1445 = vmatprep.subr.mxu0 0.0
    %1446 = vmatpush1.msra.mxu0 0.0
    %1447 = vmatprep.subr.mxu0 0.0
    %1448 = vmatpush1.msra.mxu0 0.0
    %1449 = vmatprep.subr.mxu0 0.0
    %1450 = vmatpush1.msra.mxu0 0.0
    %1451 = vmatprep.subr.mxu0 0.0
    %1452 = vmatpush1.msra.mxu0 0.0
    %1453 = vmatprep.subr.mxu0 0.0
    %1454 = vmatpush1.msra.mxu0 0.0
    %1455 = vmatprep.subr.mxu0 0.0
    %1456 = vmatpush1.msra.mxu0 0.0
    %1457 = vmatprep.subr.mxu0 0.0
    %1458 = vmatpush1.msra.mxu0 0.0
    %1459 = vmatprep.mubr.f32.mxu0 0.0
    %1460 = vmatmul.mubr.f32.gmra.mrb[0].mxu0 %v1393
    %v1461 = vpop.f32.mrb[0].mxu0
    %v1462 = vadd.f32 0.0, %v1461
    %v1463 = vpop.f32.mrb[0].mxu0
    %1464 = vdwg.mxu0
    %v1465 = vadd.f32 %v933, %v1462
    %v1466 = vmax.f32 %v1465, 0.0
    %v1468 = vsel %vm184, %v1466, 0
    %1470 = vmatprep.subr.mxu0 0.0
    %1471 = vmatpush1.msra.mxu0 %v941
    %1472 = vmatprep.subr.mxu0 0.0
    %1473 = vmatpush1.msra.mxu0 %v942
    %1474 = vmatprep.subr.mxu0 0.0
    %1475 = vmatpush1.msra.mxu0 %v943
    %1476 = vmatprep.subr.mxu0 0.0
    %1477 = vmatpush1.msra.mxu0 %v944
    %1478 = vmatprep.subr.mxu0 0.0
    %1479 = vmatpush1.msra.mxu0 0.0
    %1480 = vmatprep.subr.mxu0 0.0
    %1481 = vmatpush1.msra.mxu0 0.0
    %1482 = vmatprep.subr.mxu0 0.0
    %1483 = vmatpush1.msra.mxu0 0.0
    %1484 = vmatprep.subr.mxu0 0.0
    %1485 = vmatpush1.msra.mxu0 0.0
    %1486 = vmatprep.subr.mxu0 0.0
    %1487 = vmatpush1.msra.mxu0 0.0
    %1488 = vmatprep.subr.mxu0 0.0
    %1489 = vmatpush1.msra.mxu0 0.0
    %1490 = vmatprep.subr.mxu0 0.0
    %1491 = vmatpush1.msra.mxu0 0.0
    %1492 = vmatprep.subr.mxu0 0.0
    %1493 = vmatpush1.msra.mxu0 0.0
    %1494 = vmatprep.subr.mxu0 0.0
    %1495 = vmatpush1.msra.mxu0 0.0
    %1496 = vmatprep.subr.mxu0 0.0
    %1497 = vmatpush1.msra.mxu0 0.0
    %1498 = vmatprep.subr.mxu0 0.0
    %1499 = vmatpush1.msra.mxu0 0.0
    %1500 = vmatprep.subr.mxu0 0.0
    %1501 = vmatpush1.msra.mxu0 0.0
    %1502 = vmatprep.subr.mxu0 0.0
    %1503 = vmatpush1.msra.mxu0 0.0
    %1504 = vmatprep.subr.mxu0 0.0
    %1505 = vmatpush1.msra.mxu0 0.0
    %1506 = vmatprep.subr.mxu0 0.0
    %1507 = vmatpush1.msra.mxu0 0.0
    %1508 = vmatprep.subr.mxu0 0.0
    %1509 = vmatpush1.msra.mxu0 0.0
    %1510 = vmatprep.subr.mxu0 0.0
    %1511 = vmatpush1.msra.mxu0 0.0
    %1512 = vmatprep.subr.mxu0 0.0
    %1513 = vmatpush1.msra.mxu0 0.0
    %1514 = vmatprep.subr.mxu0 0.0
    %1515 = vmatpush1.msra.mxu0 0.0
    %1516 = vmatprep.subr.mxu0 0.0
    %1517 = vmatpush1.msra.mxu0 0.0
    %1518 = vmatprep.subr.mxu0 0.0
    %1519 = vmatpush1.msra.mxu0 0.0
    %1520 = vmatprep.subr.mxu0 0.0
    %1521 = vmatpush1.msra.mxu0 0.0
    %1522 = vmatprep.subr.mxu0 0.0
    %1523 = vmatpush1.msra.mxu0 0.0
    %1524 = vmatprep.subr.mxu0 0.0
    %1525 = vmatpush1.msra.mxu0 0.0
    %1526 = vmatprep.subr.mxu0 0.0
    %1527 = vmatpush1.msra.mxu0 0.0
    %1528 = vmatprep.subr.mxu0 0.0
    %1529 = vmatpush1.msra.mxu0 0.0
    %1530 = vmatprep.subr.mxu0 0.0
    %1531 = vmatpush1.msra.mxu0 0.0
    %1532 = vmatprep.subr.mxu0 0.0
    %1533 = vmatpush1.msra.mxu0 0.0
    %1534 = vmatprep.mubr.f32.mxu0 0.0
    %1535 = vmatmul.mubr.f32.gmra.mrb[0].mxu0 %v1468
    %v1536 = vpop.f32.mrb[0].mxu0
    %v1537 = vadd.f32 0.0, %v1536
    %v1538 = vpop.f32.mrb[0].mxu0
    %1539 = vdwg.mxu0
    %v1540 = vadd.f32 %v938, %v1537
    %v1541 = vmax.f32 %v1540, 0.0
    %v1542 = vld [vmem:[%s7] sm:$0xff]
    %v1543 = vld [vmem:[%s7 + $0x8] sm:$0xff]
    %v1544 = vld [vmem:[%s7 + $0x10] sm:$0xff]
    %v1545 = vld [vmem:[%s7 + $0x18] sm:$0xff]
    %v1546 = vld [vmem:[%s8] sm:$0x1]
    %v1548 = vlaneseq
    %v1549 = vshrl.u32 %v1548, 7
    %v1550 = vsub.s32 0, %v1549
    %v1551 = vrot.slane %v1546, %v1550
    %v1554 = vsel %vm184, %v1541, 0
    %1556 = vmatprep.subr.mxu0 0.0
    %1557 = vmatpush1.msra.mxu0 %v1542
    %1558 = vmatprep.subr.mxu0 0.0
    %1559 = vmatpush1.msra.mxu0 %v1543
    %1560 = vmatprep.subr.mxu0 0.0
    %1561 = vmatpush1.msra.mxu0 %v1544
    %1562 = vmatprep.subr.mxu0 0.0
    %1563 = vmatpush1.msra.mxu0 %v1545
    %1564 = vmatprep.subr.mxu0 0.0
    %1565 = vmatpush1.msra.mxu0 0.0
    %1566 = vmatprep.subr.mxu0 0.0
    %1567 = vmatpush1.msra.mxu0 0.0
    %1568 = vmatprep.subr.mxu0 0.0
    %1569 = vmatpush1.msra.mxu0 0.0
    %1570 = vmatprep.subr.mxu0 0.0
    %1571 = vmatpush1.msra.mxu0 0.0
    %1572 = vmatprep.subr.mxu0 0.0
    %1573 = vmatpush1.msra.mxu0 0.0
    %1574 = vmatprep.subr.mxu0 0.0
    %1575 = vmatpush1.msra.mxu0 0.0
    %1576 = vmatprep.subr.mxu0 0.0
    %1577 = vmatpush1.msra.mxu0 0.0
    %1578 = vmatprep.subr.mxu0 0.0
    %1579 = vmatpush1.msra.mxu0 0.0
    %1580 = vmatprep.subr.mxu0 0.0
    %1581 = vmatpush1.msra.mxu0 0.0
    %1582 = vmatprep.subr.mxu0 0.0
    %1583 = vmatpush1.msra.mxu0 0.0
    %1584 = vmatprep.subr.mxu0 0.0
    %1585 = vmatpush1.msra.mxu0 0.0
    %1586 = vmatprep.subr.mxu0 0.0
    %1587 = vmatpush1.msra.mxu0 0.0
    %1588 = vmatprep.subr.mxu0 0.0
    %1589 = vmatpush1.msra.mxu0 0.0
    %1590 = vmatprep.subr.mxu0 0.0
    %1591 = vmatpush1.msra.mxu0 0.0
    %1592 = vmatprep.subr.mxu0 0.0
    %1593 = vmatpush1.msra.mxu0 0.0
    %1594 = vmatprep.subr.mxu0 0.0
    %1595 = vmatpush1.msra.mxu0 0.0
    %1596 = vmatprep.subr.mxu0 0.0
    %1597 = vmatpush1.msra.mxu0 0.0
    %1598 = vmatprep.subr.mxu0 0.0
    %1599 = vmatpush1.msra.mxu0 0.0
    %1600 = vmatprep.subr.mxu0 0.0
    %1601 = vmatpush1.msra.mxu0 0.0
    %1602 = vmatprep.subr.mxu0 0.0
    %1603 = vmatpush1.msra.mxu0 0.0
    %1604 = vmatprep.subr.mxu0 0.0
    %1605 = vmatpush1.msra.mxu0 0.0
    %1606 = vmatprep.subr.mxu0 0.0
    %1607 = vmatpush1.msra.mxu0 0.0
    %1608 = vmatprep.subr.mxu0 0.0
    %1609 = vmatpush1.msra.mxu0 0.0
    %1610 = vmatprep.subr.mxu0 0.0
    %1611 = vmatpush1.msra.mxu0 0.0
    %1612 = vmatprep.subr.mxu0 0.0
    %1613 = vmatpush1.msra.mxu0 0.0
    %1614 = vmatprep.subr.mxu0 0.0
    %1615 = vmatpush1.msra.mxu0 0.0
    %1616 = vmatprep.subr.mxu0 0.0
    %1617 = vmatpush1.msra.mxu0 0.0
    %1618 = vmatprep.subr.mxu0 0.0
    %1619 = vmatpush1.msra.mxu0 0.0
    %1620 = vmatprep.mubr.f32.mxu0 0.0
    %1621 = vmatmul.mubr.f32.gmra.mrb[0].mxu0 %v1554
    %v1622 = vpop.f32.mrb[0].mxu0
    %v1623 = vadd.f32 %v1551, %v1622
    %v1624 = vpop.f32.mrb[0].mxu0
    %1625 = vdwg.mxu0
    %1626 = vst [vmem:[#allocation3] sm:$0xff] %v1623
    // Predicated region
    $region38: #{rnn_model_forward.1} parent=1 // pred_check
      _
    $region39: #{rnn_model_forward.1} parent=1 // pred_check_branch
      %1628 = sbr.rel (0) target = $region41
    $region40: #{rnn_model_forward.1} parent=1 // pred_region
      %s1630 = ssub.s32 128, 128
      %1631 = vsyncadd [#allocation4], %s1630
      %s1633 = sshll.u32 [#allocation3], 4
      %s1634 = int_to_ptr.vmem [resolvable:$true] %s1633
      %1636 = dma.vmem_to_hbm [thread:$0]  %s1634, 128, %s9, [#allocation4]
    $region41: #{rnn_model_forward.1} parent=1 // pred_fallthru
      _
    // Predicated region
    $region42: #{rnn_model_forward.1} parent=1 // pred_check
      _
    $region43: #{rnn_model_forward.1} parent=1 // pred_check_branch
      %1638 = sbr.rel (0) target = $region45
    $region44: #{rnn_model_forward.1} parent=1 // pred_region
      %1639 = dma.done [#allocation4], 128
    $region45: #{rnn_model_forward.1} parent=1 // pred_fallthru
      _
    %1640 = vsyncpa [#allocation4], 1

</llo_original>
